<compile_context>
chip_gen: v6e
topology: v6e:2x2x1
jax: 0.10.0
libtpu: 0.0.40
codegen_flags: <defaults>
</compile_context>

<pallas_src>
import jax
import jax.numpy as jnp
from jax import lax
from jax.experimental import pallas as pl
from jax.experimental.pallas import tpu as pltpu


EMB = 32          # embedding_dim (== LSTM hidden size)
DENSE = 32        # dense_layer_size
BN_EPS = 1e-5


def _devmap_kernel(x_ref, aux_ref,
                   wih1_ref, whh1_ref, b1_ref,
                   w2s_ref, b2_ref,
                   wlm_ref, blm_ref,
                   gamma_ref, beta_ref,
                   wd1_ref, bd1_ref,
                   wout_ref, bout_ref,
                   out_ref,            # (B, 4) = [final | lang]
                   gx_ref):            # VMEM scratch (T, B, 4H)
    T, B, E = x_ref.shape
    H = E

    # ---- layer-1 input projection: one large MXU matmul, hoisted out of the
    # recurrent loop (bias b1 = b_ih1 + b_hh1 added once here).
    x_flat = x_ref[...].astype(jnp.float32).reshape(T * B, E)
    gx = jnp.dot(x_flat, wih1_ref[...],
                 preferred_element_type=jnp.float32) + b1_ref[...]
    gx_ref[...] = gx.reshape(T, B, 4 * H)

    # ---- hoist weight / bias loads out of the serial loop.
    whh1 = whh1_ref[...]        # (H, 4H)
    w2s = w2s_ref[...]          # (2H, 4H)  == [Wih2_t ; Whh2_t]
    b2 = b2_ref[...]            # (1, 4H)

    def activate(gates):
        # Whole-vreg transcendentals (EUP), then lane slices. PyTorch gate
        # order is [i, f, g, o].
        sig = jax.nn.sigmoid(gates)
        tg = jnp.tanh(gates)
        i = sig[:, 0:H]
        f = sig[:, H:2 * H]
        g = tg[:, 2 * H:3 * H]
        o = sig[:, 3 * H:4 * H]
        return i, f, g, o

    def step(t, carry):
        h1, c1, h2, c2 = carry
        # layer 1: precomputed input gates + recurrent dot only
        g1 = gx_ref[t] + jnp.dot(h1, whh1, preferred_element_type=jnp.float32)
        i1, f1, gg1, o1 = activate(g1)
        c1 = f1 * c1 + i1 * gg1
        h1 = o1 * jnp.tanh(c1)
        # layer 2: fused [x, h] dot against stacked weight
        xh = jnp.concatenate([h1, h2], axis=1)                 # (B, 2H)
        g2 = jnp.dot(xh, w2s, preferred_element_type=jnp.float32) + b2
        i2, f2, gg2, o2 = activate(g2)
        c2 = f2 * c2 + i2 * gg2
        h2 = o2 * jnp.tanh(c2)
        return (h1, c1, h2, c2)

    z = jnp.zeros((B, H), jnp.float32)
    _, _, h2, _ = lax.fori_loop(0, T, step, (z, z, z, z), unroll=True)

    # ---- language-model head: sigmoid(Linear(E -> 2))
    lang = jax.nn.sigmoid(
        jnp.dot(h2, wlm_ref[...], preferred_element_type=jnp.float32)
        + blm_ref[...])

    # ---- concat(aux, last_hidden) -> (B, E + 2)
    xc = jnp.concatenate([aux_ref[...].astype(jnp.float32), h2], axis=1)

    # ---- BatchNorm1d (training mode: batch mean, biased variance)
    mean = jnp.mean(xc, axis=0, keepdims=True)
    var = jnp.mean((xc - mean) * (xc - mean), axis=0, keepdims=True)
    xn = (xc - mean) * lax.rsqrt(var + BN_EPS)
    xn = xn * gamma_ref[...] + beta_ref[...]

    # ---- dense_1 + relu
    d1 = jnp.dot(xn, wd1_ref[...], preferred_element_type=jnp.float32) + bd1_ref[...]
    d1 = jnp.maximum(d1, 0.0)

    # ---- output + sigmoid
    final = jax.nn.sigmoid(
        jnp.dot(d1, wout_ref[...], preferred_element_type=jnp.float32)
        + bout_ref[...])

    # single lane-denser output slab: [final | lang]
    out_ref[...] = jnp.concatenate([final, lang], axis=1).astype(out_ref.dtype)


@jax.jit
def devmap_lstm_forward(x_btE, aux, params):
    """x_btE: (B, T, E) batch_first like PyTorch. aux: (B, 2)."""
    B, T, E = x_btE.shape
    x_tbE = jnp.transpose(x_btE, (1, 0, 2))   # time-major for the kernel

    # Pre-stack layer-2 weights so the kernel does one fused [h1,h2] dot.
    w2s = jnp.concatenate([params["wih2_t"], params["whh2_t"]], axis=0)  # (2E, 4E)

    vmem = pl.BlockSpec(memory_space=pltpu.MemorySpace.VMEM)
    args = (
        x_tbE, aux,
        params["wih1_t"], params["whh1_t"], params["b1"],
        w2s, params["b2"],
        params["wlm_t"], params["blm"],
        params["gamma"], params["beta"],
        params["wd1_t"], params["bd1"],
        params["wout_t"], params["bout"],
    )

    H4 = 4 * E
    flops = (2 * T * B * E * H4                       # input projection
             + T * (2 * B * E * H4 + 2 * B * 2 * E * H4)   # recurrences
             + 2 * B * E * 2 + 2 * B * (E + 2) * DENSE + 2 * B * DENSE * 2)
    transcendentals = T * B * (2 * H4 + E) * 2 + B * 4
    bytes_accessed = 4 * (x_tbE.size + aux.size + B * 4
                          + sum(int(a.size) for a in args[2:]))

    out = pl.pallas_call(
        _devmap_kernel,
        out_shape=jax.ShapeDtypeStruct((B, 4), jnp.float32),
        in_specs=[vmem] * len(args),
        out_specs=vmem,
        scratch_shapes=[pltpu.VMEM((T, B, 4 * E), jnp.float32)],
        cost_estimate=pl.CostEstimate(flops=int(flops),
                                      transcendentals=int(transcendentals),
                                      bytes_accessed=int(bytes_accessed)),
    )(*args)
    final = out[:, 0:2]
    lang = out[:, 2:4]
    return final, lang


def init_params(key, emb=EMB, dense=DENSE):
    """Deterministic synthetic init mimicking PyTorch's uniform(-1/sqrt(fan), 1/sqrt(fan))."""
    ks = jax.random.split(key, 16)
    s = 1.0 / jnp.sqrt(jnp.float32(emb))

    def u(k, shape, scale):
        return jax.random.uniform(k, shape, jnp.float32, -scale, scale)

    p = {}
    # LSTM layer 1 (weights stored transposed: (in, 4H))
    p["wih1_t"] = u(ks[0], (emb, 4 * emb), s)
    p["whh1_t"] = u(ks[1], (emb, 4 * emb), s)
    p["b1"] = u(ks[2], (1, 4 * emb), s) + u(ks[3], (1, 4 * emb), s)  # b_ih + b_hh
    # LSTM layer 2
    p["wih2_t"] = u(ks[4], (emb, 4 * emb), s)
    p["whh2_t"] = u(ks[5], (emb, 4 * emb), s)
    p["b2"] = u(ks[6], (1, 4 * emb), s) + u(ks[7], (1, 4 * emb), s)
    # language_model_out: Linear(emb, 2)
    p["wlm_t"] = u(ks[8], (emb, 2), s)
    p["blm"] = u(ks[9], (1, 2), s)
    # batch_norm (PyTorch default init)
    p["gamma"] = jnp.ones((1, emb + 2), jnp.float32)
    p["beta"] = jnp.zeros((1, emb + 2), jnp.float32)
    # dense_1: Linear(emb + 2, dense)
    s1 = 1.0 / jnp.sqrt(jnp.float32(emb + 2))
    p["wd1_t"] = u(ks[10], (emb + 2, dense), s1)
    p["bd1"] = u(ks[11], (1, dense), s1)
    # output: Linear(dense, 2)
    s2 = 1.0 / jnp.sqrt(jnp.float32(dense))
    p["wout_t"] = u(ks[12], (dense, 2), s2)
    p["bout"] = u(ks[13], (1, 2), s2)
    return p


def reference_forward(x, aux, p):
    """Pure-JAX reference of the PyTorch forward (for sanity checking)."""
    B, T, E = x.shape
    H = E

    def cell(xt, h, c, wih_t, whh_t, b):
        g = xt @ wih_t + h @ whh_t + b
        i = jax.nn.sigmoid(g[:, :H])
        f = jax.nn.sigmoid(g[:, H:2 * H])
        gg = jnp.tanh(g[:, 2 * H:3 * H])
        o = jax.nn.sigmoid(g[:, 3 * H:])
        c = f * c + i * gg
        return o * jnp.tanh(c), c

    z = jnp.zeros((B, H), jnp.float32)
    h1, c1, h2, c2 = z, z, z, z
    for t in range(T):
        h1, c1 = cell(x[:, t, :], h1, c1, p["wih1_t"], p["whh1_t"], p["b1"])
        h2, c2 = cell(h1, h2, c2, p["wih2_t"], p["whh2_t"], p["b2"])
    lang = jax.nn.sigmoid(h2 @ p["wlm_t"] + p["blm"])
    xc = jnp.concatenate([aux, h2], axis=1)
    mean = jnp.mean(xc, axis=0, keepdims=True)
    var = jnp.mean((xc - mean) ** 2, axis=0, keepdims=True)
    xn = (xc - mean) / jnp.sqrt(var + BN_EPS) * p["gamma"] + p["beta"]
    d1 = jnp.maximum(xn @ p["wd1_t"] + p["bd1"], 0.0)
    final = jax.nn.sigmoid(d1 @ p["wout_t"] + p["bout"])
    return final, lang


if __name__ == "__main__":
    key = jax.random.PRNGKey(0)
    k_x, k_aux, k_p = jax.random.split(key, 3)

    B, T, E = 8, 8, EMB      # B=8 keeps the batch sublane-aligned
    x = jax.random.normal(k_x, (B, T, E), jnp.float32)
    aux = jax.random.normal(k_aux, (B, 2), jnp.float32)
    params = init_params(k_p)

    final, lang = devmap_lstm_forward(x, aux, params)
    final = jax.block_until_ready(final)
    lang = jax.block_until_ready(lang)

    ref_final, ref_lang = reference_forward(x, aux, params)
    assert jnp.allclose(final, ref_final, rtol=2e-3, atol=2e-3), "final mismatch"
    assert jnp.allclose(lang, ref_lang, rtol=2e-3, atol=2e-3), "lang mismatch"

    print("KERNEL_OK")
</pallas_src>

<mosaic_0001>
module attributes {stable_mosaic.version = 11 : i64} {
  func.func @_devmap_kernel(%arg0: memref<8x8x32xf32, #tpu.memory_space<vmem>>, %arg1: memref<8x2xf32, #tpu.memory_space<vmem>>, %arg2: memref<32x128xf32, #tpu.memory_space<vmem>>, %arg3: memref<32x128xf32, #tpu.memory_space<vmem>>, %arg4: memref<1x128xf32, #tpu.memory_space<vmem>>, %arg5: memref<64x128xf32, #tpu.memory_space<vmem>>, %arg6: memref<1x128xf32, #tpu.memory_space<vmem>>, %arg7: memref<32x2xf32, #tpu.memory_space<vmem>>, %arg8: memref<1x2xf32, #tpu.memory_space<vmem>>, %arg9: memref<1x34xf32, #tpu.memory_space<vmem>>, %arg10: memref<1x34xf32, #tpu.memory_space<vmem>>, %arg11: memref<34x32xf32, #tpu.memory_space<vmem>>, %arg12: memref<1x32xf32, #tpu.memory_space<vmem>>, %arg13: memref<32x2xf32, #tpu.memory_space<vmem>>, %arg14: memref<1x2xf32, #tpu.memory_space<vmem>>, %arg15: memref<8x4xf32, #tpu.memory_space<vmem>>, %arg16: memref<8x8x128xf32, #tpu.memory_space<vmem>>) attributes {dimension_semantics = [], scalar_prefetch = 0 : i64, scratch_operands = 1 : i64, tpu.core_type = #tpu.core_type<tc>} {
    %c0 = arith.constant 0 : index
    %c0_0 = arith.constant 0 : index
    %c0_1 = arith.constant 0 : index
    %0 = vector.load %arg0[%c0, %c0_0, %c0_1] : memref<8x8x32xf32, #tpu.memory_space<vmem>>, vector<8x8x32xf32>
    %1 = vector.shape_cast %0 : vector<8x8x32xf32> to vector<64x32xf32>
    %c0_2 = arith.constant 0 : index
    %c0_3 = arith.constant 0 : index
    %2 = vector.load %arg2[%c0_2, %c0_3] : memref<32x128xf32, #tpu.memory_space<vmem>>, vector<32x128xf32>
    %cst = arith.constant dense<0.000000e+00> : vector<64x128xf32>
    %3 = tpu.matmul %1, %2, %cst {dimension_numbers = #tpu.dot_dimension_numbers<[1], [0], [0], [1], [0, 0, 1, 1], [], []>} : vector<64x32xf32>, vector<32x128xf32>, vector<64x128xf32> -> vector<64x128xf32>
    %c0_4 = arith.constant 0 : index
    %c0_5 = arith.constant 0 : index
    %4 = vector.load %arg4[%c0_4, %c0_5] : memref<1x128xf32, #tpu.memory_space<vmem>>, vector<1x128xf32>
    %5 = vector.broadcast %4 : vector<1x128xf32> to vector<64x128xf32>
    %6 = arith.addf %3, %5 : vector<64x128xf32>
    %7 = vector.shape_cast %6 : vector<64x128xf32> to vector<8x8x128xf32>
    %c0_6 = arith.constant 0 : index
    %c0_7 = arith.constant 0 : index
    %c0_8 = arith.constant 0 : index
    %8 = vector.load %arg16[%c0_6, %c0_7, %c0_8] : memref<8x8x128xf32, #tpu.memory_space<vmem>>, vector<8x8x128xf32>
    tpu.vector_store %arg16[%c0_6, %c0_7, %c0_8], %7 {strides = array<i32>} : memref<8x8x128xf32, #tpu.memory_space<vmem>>, vector<8x8x128xf32>,
    %c0_9 = arith.constant 0 : index
    %c0_10 = arith.constant 0 : index
    %9 = vector.load %arg3[%c0_9, %c0_10] : memref<32x128xf32, #tpu.memory_space<vmem>>, vector<32x128xf32>
    %c0_11 = arith.constant 0 : index
    %c0_12 = arith.constant 0 : index
    %10 = vector.load %arg5[%c0_11, %c0_12] : memref<64x128xf32, #tpu.memory_space<vmem>>, vector<64x128xf32>
    %c0_13 = arith.constant 0 : index
    %c0_14 = arith.constant 0 : index
    %11 = vector.load %arg6[%c0_13, %c0_14] : memref<1x128xf32, #tpu.memory_space<vmem>>, vector<1x128xf32>
    %cst_15 = arith.constant 0.000000e+00 : f32
    %12 = vector.broadcast %cst_15 : f32 to vector<8x32xf32>
    %c0_i32 = arith.constant 0 : i32
    %13 = arith.index_cast %c0_i32 : i32 to index
    %c0_16 = arith.constant 0 : index
    %c0_17 = arith.constant 0 : index
    %14 = vector.load %arg16[%13, %c0_16, %c0_17] : memref<8x8x128xf32, #tpu.memory_space<vmem>>, vector<1x8x128xf32>
    %15 = vector.shape_cast %14 : vector<1x8x128xf32> to vector<8x128xf32>
    %cst_18 = arith.constant dense<0.000000e+00> : vector<8x128xf32>
    %16 = tpu.matmul %12, %9, %cst_18 {dimension_numbers = #tpu.dot_dimension_numbers<[1], [0], [0], [1], [0, 0, 1, 1], [], []>} : vector<8x32xf32>, vector<32x128xf32>, vector<8x128xf32> -> vector<8x128xf32>
    %17 = arith.addf %15, %16 : vector<8x128xf32>
    %18 = arith.negf %17 : vector<8x128xf32>
    %19 = math.exp %18 : vector<8x128xf32>
    %cst_19 = arith.constant 1.000000e+00 : f32
    %20 = vector.broadcast %cst_19 : f32 to vector<8x128xf32>
    %21 = arith.addf %20, %19 : vector<8x128xf32>
    %22 = arith.divf %20, %21 : vector<8x128xf32>
    %23 = math.tanh %17 : vector<8x128xf32>
    %24 = vector.extract_strided_slice %22 {offsets = [0, 0], sizes = [8, 32], strides = [1, 1]} : vector<8x128xf32> to vector<8x32xf32>
    %25 = vector.extract_strided_slice %22 {offsets = [0, 32], sizes = [8, 32], strides = [1, 1]} : vector<8x128xf32> to vector<8x32xf32>
    %26 = vector.extract_strided_slice %23 {offsets = [0, 64], sizes = [8, 32], strides = [1, 1]} : vector<8x128xf32> to vector<8x32xf32>
    %27 = vector.extract_strided_slice %22 {offsets = [0, 96], sizes = [8, 32], strides = [1, 1]} : vector<8x128xf32> to vector<8x32xf32>
    %28 = arith.mulf %25, %12 : vector<8x32xf32>
    %29 = arith.mulf %24, %26 : vector<8x32xf32>
    %30 = arith.addf %28, %29 : vector<8x32xf32>
    %31 = math.tanh %30 : vector<8x32xf32>
    %32 = arith.mulf %27, %31 : vector<8x32xf32>
    %33 = tpu.concatenate %32, %12 in 1 : vector<8x32xf32>, vector<8x32xf32> -> vector<8x64xf32>
    %cst_20 = arith.constant dense<0.000000e+00> : vector<8x128xf32>
    %34 = tpu.matmul %33, %10, %cst_20 {dimension_numbers = #tpu.dot_dimension_numbers<[1], [0], [0], [1], [0, 0, 1, 1], [], []>} : vector<8x64xf32>, vector<64x128xf32>, vector<8x128xf32> -> vector<8x128xf32>
    %35 = vector.broadcast %11 : vector<1x128xf32> to vector<8x128xf32>
    %36 = arith.addf %34, %35 : vector<8x128xf32>
    %37 = arith.negf %36 : vector<8x128xf32>
    %38 = math.exp %37 : vector<8x128xf32>
    %cst_21 = arith.constant 1.000000e+00 : f32
    %39 = vector.broadcast %cst_21 : f32 to vector<8x128xf32>
    %40 = arith.addf %39, %38 : vector<8x128xf32>
    %41 = arith.divf %39, %40 : vector<8x128xf32>
    %42 = math.tanh %36 : vector<8x128xf32>
    %43 = vector.extract_strided_slice %41 {offsets = [0, 0], sizes = [8, 32], strides = [1, 1]} : vector<8x128xf32> to vector<8x32xf32>
    %44 = vector.extract_strided_slice %41 {offsets = [0, 32], sizes = [8, 32], strides = [1, 1]} : vector<8x128xf32> to vector<8x32xf32>
    %45 = vector.extract_strided_slice %42 {offsets = [0, 64], sizes = [8, 32], strides = [1, 1]} : vector<8x128xf32> to vector<8x32xf32>
    %46 = vector.extract_strided_slice %41 {offsets = [0, 96], sizes = [8, 32], strides = [1, 1]} : vector<8x128xf32> to vector<8x32xf32>
    %47 = arith.mulf %44, %12 : vector<8x32xf32>
    %48 = arith.mulf %43, %45 : vector<8x32xf32>
    %49 = arith.addf %47, %48 : vector<8x32xf32>
    %50 = math.tanh %49 : vector<8x32xf32>
    %51 = arith.mulf %46, %50 : vector<8x32xf32>
    %c1_i32 = arith.constant 1 : i32
    %52 = arith.index_cast %c1_i32 : i32 to index
    %c0_22 = arith.constant 0 : index
    %c0_23 = arith.constant 0 : index
    %53 = vector.load %arg16[%52, %c0_22, %c0_23] : memref<8x8x128xf32, #tpu.memory_space<vmem>>, vector<1x8x128xf32>
    %54 = vector.shape_cast %53 : vector<1x8x128xf32> to vector<8x128xf32>
    %cst_24 = arith.constant dense<0.000000e+00> : vector<8x128xf32>
    %55 = tpu.matmul %32, %9, %cst_24 {dimension_numbers = #tpu.dot_dimension_numbers<[1], [0], [0], [1], [0, 0, 1, 1], [], []>} : vector<8x32xf32>, vector<32x128xf32>, vector<8x128xf32> -> vector<8x128xf32>
    %56 = arith.addf %54, %55 : vector<8x128xf32>
    %57 = arith.negf %56 : vector<8x128xf32>
    %58 = math.exp %57 : vector<8x128xf32>
    %cst_25 = arith.constant 1.000000e+00 : f32
    %59 = vector.broadcast %cst_25 : f32 to vector<8x128xf32>
    %60 = arith.addf %59, %58 : vector<8x128xf32>
    %61 = arith.divf %59, %60 : vector<8x128xf32>
    %62 = math.tanh %56 : vector<8x128xf32>
    %63 = vector.extract_strided_slice %61 {offsets = [0, 0], sizes = [8, 32], strides = [1, 1]} : vector<8x128xf32> to vector<8x32xf32>
    %64 = vector.extract_strided_slice %61 {offsets = [0, 32], sizes = [8, 32], strides = [1, 1]} : vector<8x128xf32> to vector<8x32xf32>
    %65 = vector.extract_strided_slice %62 {offsets = [0, 64], sizes = [8, 32], strides = [1, 1]} : vector<8x128xf32> to vector<8x32xf32>
    %66 = vector.extract_strided_slice %61 {offsets = [0, 96], sizes = [8, 32], strides = [1, 1]} : vector<8x128xf32> to vector<8x32xf32>
    %67 = arith.mulf %64, %30 : vector<8x32xf32>
    %68 = arith.mulf %63, %65 : vector<8x32xf32>
    %69 = arith.addf %67, %68 : vector<8x32xf32>
    %70 = math.tanh %69 : vector<8x32xf32>
    %71 = arith.mulf %66, %70 : vector<8x32xf32>
    %72 = tpu.concatenate %71, %51 in 1 : vector<8x32xf32>, vector<8x32xf32> -> vector<8x64xf32>
    %cst_26 = arith.constant dense<0.000000e+00> : vector<8x128xf32>
    %73 = tpu.matmul %72, %10, %cst_26 {dimension_numbers = #tpu.dot_dimension_numbers<[1], [0], [0], [1], [0, 0, 1, 1], [], []>} : vector<8x64xf32>, vector<64x128xf32>, vector<8x128xf32> -> vector<8x128xf32>
    %74 = vector.broadcast %11 : vector<1x128xf32> to vector<8x128xf32>
    %75 = arith.addf %73, %74 : vector<8x128xf32>
    %76 = arith.negf %75 : vector<8x128xf32>
    %77 = math.exp %76 : vector<8x128xf32>
    %cst_27 = arith.constant 1.000000e+00 : f32
    %78 = vector.broadcast %cst_27 : f32 to vector<8x128xf32>
    %79 = arith.addf %78, %77 : vector<8x128xf32>
    %80 = arith.divf %78, %79 : vector<8x128xf32>
    %81 = math.tanh %75 : vector<8x128xf32>
    %82 = vector.extract_strided_slice %80 {offsets = [0, 0], sizes = [8, 32], strides = [1, 1]} : vector<8x128xf32> to vector<8x32xf32>
    %83 = vector.extract_strided_slice %80 {offsets = [0, 32], sizes = [8, 32], strides = [1, 1]} : vector<8x128xf32> to vector<8x32xf32>
    %84 = vector.extract_strided_slice %81 {offsets = [0, 64], sizes = [8, 32], strides = [1, 1]} : vector<8x128xf32> to vector<8x32xf32>
    %85 = vector.extract_strided_slice %80 {offsets = [0, 96], sizes = [8, 32], strides = [1, 1]} : vector<8x128xf32> to vector<8x32xf32>
    %86 = arith.mulf %83, %49 : vector<8x32xf32>
    %87 = arith.mulf %82, %84 : vector<8x32xf32>
    %88 = arith.addf %86, %87 : vector<8x32xf32>
    %89 = math.tanh %88 : vector<8x32xf32>
    %90 = arith.mulf %85, %89 : vector<8x32xf32>
    %c2_i32 = arith.constant 2 : i32
    %91 = arith.index_cast %c2_i32 : i32 to index
    %c0_28 = arith.constant 0 : index
    %c0_29 = arith.constant 0 : index
    %92 = vector.load %arg16[%91, %c0_28, %c0_29] : memref<8x8x128xf32, #tpu.memory_space<vmem>>, vector<1x8x128xf32>
    %93 = vector.shape_cast %92 : vector<1x8x128xf32> to vector<8x128xf32>
    %cst_30 = arith.constant dense<0.000000e+00> : vector<8x128xf32>
    %94 = tpu.matmul %71, %9, %cst_30 {dimension_numbers = #tpu.dot_dimension_numbers<[1], [0], [0], [1], [0, 0, 1, 1], [], []>} : vector<8x32xf32>, vector<32x128xf32>, vector<8x128xf32> -> vector<8x128xf32>
    %95 = arith.addf %93, %94 : vector<8x128xf32>
    %96 = arith.negf %95 : vector<8x128xf32>
    %97 = math.exp %96 : vector<8x128xf32>
    %cst_31 = arith.constant 1.000000e+00 : f32
    %98 = vector.broadcast %cst_31 : f32 to vector<8x128xf32>
    %99 = arith.addf %98, %97 : vector<8x128xf32>
    %100 = arith.divf %98, %99 : vector<8x128xf32>
    %101 = math.tanh %95 : vector<8x128xf32>
    %102 = vector.extract_strided_slice %100 {offsets = [0, 0], sizes = [8, 32], strides = [1, 1]} : vector<8x128xf32> to vector<8x32xf32>
    %103 = vector.extract_strided_slice %100 {offsets = [0, 32], sizes = [8, 32], strides = [1, 1]} : vector<8x128xf32> to vector<8x32xf32>
    %104 = vector.extract_strided_slice %101 {offsets = [0, 64], sizes = [8, 32], strides = [1, 1]} : vector<8x128xf32> to vector<8x32xf32>
    %105 = vector.extract_strided_slice %100 {offsets = [0, 96], sizes = [8, 32], strides = [1, 1]} : vector<8x128xf32> to vector<8x32xf32>
    %106 = arith.mulf %103, %69 : vector<8x32xf32>
    %107 = arith.mulf %102, %104 : vector<8x32xf32>
    %108 = arith.addf %106, %107 : vector<8x32xf32>
    %109 = math.tanh %108 : vector<8x32xf32>
    %110 = arith.mulf %105, %109 : vector<8x32xf32>
    %111 = tpu.concatenate %110, %90 in 1 : vector<8x32xf32>, vector<8x32xf32> -> vector<8x64xf32>
    %cst_32 = arith.constant dense<0.000000e+00> : vector<8x128xf32>
    %112 = tpu.matmul %111, %10, %cst_32 {dimension_numbers = #tpu.dot_dimension_numbers<[1], [0], [0], [1], [0, 0, 1, 1], [], []>} : vector<8x64xf32>, vector<64x128xf32>, vector<8x128xf32> -> vector<8x128xf32>
    %113 = vector.broadcast %11 : vector<1x128xf32> to vector<8x128xf32>
    %114 = arith.addf %112, %113 : vector<8x128xf32>
    %115 = arith.negf %114 : vector<8x128xf32>
    %116 = math.exp %115 : vector<8x128xf32>
    %cst_33 = arith.constant 1.000000e+00 : f32
    %117 = vector.broadcast %cst_33 : f32 to vector<8x128xf32>
    %118 = arith.addf %117, %116 : vector<8x128xf32>
    %119 = arith.divf %117, %118 : vector<8x128xf32>
    %120 = math.tanh %114 : vector<8x128xf32>
    %121 = vector.extract_strided_slice %119 {offsets = [0, 0], sizes = [8, 32], strides = [1, 1]} : vector<8x128xf32> to vector<8x32xf32>
    %122 = vector.extract_strided_slice %119 {offsets = [0, 32], sizes = [8, 32], strides = [1, 1]} : vector<8x128xf32> to vector<8x32xf32>
    %123 = vector.extract_strided_slice %120 {offsets = [0, 64], sizes = [8, 32], strides = [1, 1]} : vector<8x128xf32> to vector<8x32xf32>
    %124 = vector.extract_strided_slice %119 {offsets = [0, 96], sizes = [8, 32], strides = [1, 1]} : vector<8x128xf32> to vector<8x32xf32>
    %125 = arith.mulf %122, %88 : vector<8x32xf32>
    %126 = arith.mulf %121, %123 : vector<8x32xf32>
    %127 = arith.addf %125, %126 : vector<8x32xf32>
    %128 = math.tanh %127 : vector<8x32xf32>
    %129 = arith.mulf %124, %128 : vector<8x32xf32>
    %c3_i32 = arith.constant 3 : i32
    %130 = arith.index_cast %c3_i32 : i32 to index
    %c0_34 = arith.constant 0 : index
    %c0_35 = arith.constant 0 : index
    %131 = vector.load %arg16[%130, %c0_34, %c0_35] : memref<8x8x128xf32, #tpu.memory_space<vmem>>, vector<1x8x128xf32>
    %132 = vector.shape_cast %131 : vector<1x8x128xf32> to vector<8x128xf32>
    %cst_36 = arith.constant dense<0.000000e+00> : vector<8x128xf32>
    %133 = tpu.matmul %110, %9, %cst_36 {dimension_numbers = #tpu.dot_dimension_numbers<[1], [0], [0], [1], [0, 0, 1, 1], [], []>} : vector<8x32xf32>, vector<32x128xf32>, vector<8x128xf32> -> vector<8x128xf32>
    %134 = arith.addf %132, %133 : vector<8x128xf32>
    %135 = arith.negf %134 : vector<8x128xf32>
    %136 = math.exp %135 : vector<8x128xf32>
    %cst_37 = arith.constant 1.000000e+00 : f32
    %137 = vector.broadcast %cst_37 : f32 to vector<8x128xf32>
    %138 = arith.addf %137, %136 : vector<8x128xf32>
    %139 = arith.divf %137, %138 : vector<8x128xf32>
    %140 = math.tanh %134 : vector<8x128xf32>
    %141 = vector.extract_strided_slice %139 {offsets = [0, 0], sizes = [8, 32], strides = [1, 1]} : vector<8x128xf32> to vector<8x32xf32>
    %142 = vector.extract_strided_slice %139 {offsets = [0, 32], sizes = [8, 32], strides = [1, 1]} : vector<8x128xf32> to vector<8x32xf32>
    %143 = vector.extract_strided_slice %140 {offsets = [0, 64], sizes = [8, 32], strides = [1, 1]} : vector<8x128xf32> to vector<8x32xf32>
    %144 = vector.extract_strided_slice %139 {offsets = [0, 96], sizes = [8, 32], strides = [1, 1]} : vector<8x128xf32> to vector<8x32xf32>
    %145 = arith.mulf %142, %108 : vector<8x32xf32>
    %146 = arith.mulf %141, %143 : vector<8x32xf32>
    %147 = arith.addf %145, %146 : vector<8x32xf32>
    %148 = math.tanh %147 : vector<8x32xf32>
    %149 = arith.mulf %144, %148 : vector<8x32xf32>
    %150 = tpu.concatenate %149, %129 in 1 : vector<8x32xf32>, vector<8x32xf32> -> vector<8x64xf32>
    %cst_38 = arith.constant dense<0.000000e+00> : vector<8x128xf32>
    %151 = tpu.matmul %150, %10, %cst_38 {dimension_numbers = #tpu.dot_dimension_numbers<[1], [0], [0], [1], [0, 0, 1, 1], [], []>} : vector<8x64xf32>, vector<64x128xf32>, vector<8x128xf32> -> vector<8x128xf32>
    %152 = vector.broadcast %11 : vector<1x128xf32> to vector<8x128xf32>
    %153 = arith.addf %151, %152 : vector<8x128xf32>
    %154 = arith.negf %153 : vector<8x128xf32>
    %155 = math.exp %154 : vector<8x128xf32>
    %cst_39 = arith.constant 1.000000e+00 : f32
    %156 = vector.broadcast %cst_39 : f32 to vector<8x128xf32>
    %157 = arith.addf %156, %155 : vector<8x128xf32>
    %158 = arith.divf %156, %157 : vector<8x128xf32>
    %159 = math.tanh %153 : vector<8x128xf32>
    %160 = vector.extract_strided_slice %158 {offsets = [0, 0], sizes = [8, 32], strides = [1, 1]} : vector<8x128xf32> to vector<8x32xf32>
    %161 = vector.extract_strided_slice %158 {offsets = [0, 32], sizes = [8, 32], strides = [1, 1]} : vector<8x128xf32> to vector<8x32xf32>
    %162 = vector.extract_strided_slice %159 {offsets = [0, 64], sizes = [8, 32], strides = [1, 1]} : vector<8x128xf32> to vector<8x32xf32>
    %163 = vector.extract_strided_slice %158 {offsets = [0, 96], sizes = [8, 32], strides = [1, 1]} : vector<8x128xf32> to vector<8x32xf32>
    %164 = arith.mulf %161, %127 : vector<8x32xf32>
    %165 = arith.mulf %160, %162 : vector<8x32xf32>
    %166 = arith.addf %164, %165 : vector<8x32xf32>
    %167 = math.tanh %166 : vector<8x32xf32>
    %168 = arith.mulf %163, %167 : vector<8x32xf32>
    %c4_i32 = arith.constant 4 : i32
    %169 = arith.index_cast %c4_i32 : i32 to index
    %c0_40 = arith.constant 0 : index
    %c0_41 = arith.constant 0 : index
    %170 = vector.load %arg16[%169, %c0_40, %c0_41] : memref<8x8x128xf32, #tpu.memory_space<vmem>>, vector<1x8x128xf32>
    %171 = vector.shape_cast %170 : vector<1x8x128xf32> to vector<8x128xf32>
    %cst_42 = arith.constant dense<0.000000e+00> : vector<8x128xf32>
    %172 = tpu.matmul %149, %9, %cst_42 {dimension_numbers = #tpu.dot_dimension_numbers<[1], [0], [0], [1], [0, 0, 1, 1], [], []>} : vector<8x32xf32>, vector<32x128xf32>, vector<8x128xf32> -> vector<8x128xf32>
    %173 = arith.addf %171, %172 : vector<8x128xf32>
    %174 = arith.negf %173 : vector<8x128xf32>
    %175 = math.exp %174 : vector<8x128xf32>
    %cst_43 = arith.constant 1.000000e+00 : f32
    %176 = vector.broadcast %cst_43 : f32 to vector<8x128xf32>
    %177 = arith.addf %176, %175 : vector<8x128xf32>
    %178 = arith.divf %176, %177 : vector<8x128xf32>
    %179 = math.tanh %173 : vector<8x128xf32>
    %180 = vector.extract_strided_slice %178 {offsets = [0, 0], sizes = [8, 32], strides = [1, 1]} : vector<8x128xf32> to vector<8x32xf32>
    %181 = vector.extract_strided_slice %178 {offsets = [0, 32], sizes = [8, 32], strides = [1, 1]} : vector<8x128xf32> to vector<8x32xf32>
    %182 = vector.extract_strided_slice %179 {offsets = [0, 64], sizes = [8, 32], strides = [1, 1]} : vector<8x128xf32> to vector<8x32xf32>
    %183 = vector.extract_strided_slice %178 {offsets = [0, 96], sizes = [8, 32], strides = [1, 1]} : vector<8x128xf32> to vector<8x32xf32>
    %184 = arith.mulf %181, %147 : vector<8x32xf32>
    %185 = arith.mulf %180, %182 : vector<8x32xf32>
    %186 = arith.addf %184, %185 : vector<8x32xf32>
    %187 = math.tanh %186 : vector<8x32xf32>
    %188 = arith.mulf %183, %187 : vector<8x32xf32>
    %189 = tpu.concatenate %188, %168 in 1 : vector<8x32xf32>, vector<8x32xf32> -> vector<8x64xf32>
    %cst_44 = arith.constant dense<0.000000e+00> : vector<8x128xf32>
    %190 = tpu.matmul %189, %10, %cst_44 {dimension_numbers = #tpu.dot_dimension_numbers<[1], [0], [0], [1], [0, 0, 1, 1], [], []>} : vector<8x64xf32>, vector<64x128xf32>, vector<8x128xf32> -> vector<8x128xf32>
    %191 = vector.broadcast %11 : vector<1x128xf32> to vector<8x128xf32>
    %192 = arith.addf %190, %191 : vector<8x128xf32>
    %193 = arith.negf %192 : vector<8x128xf32>
    %194 = math.exp %193 : vector<8x128xf32>
    %cst_45 = arith.constant 1.000000e+00 : f32
    %195 = vector.broadcast %cst_45 : f32 to vector<8x128xf32>
    %196 = arith.addf %195, %194 : vector<8x128xf32>
    %197 = arith.divf %195, %196 : vector<8x128xf32>
    %198 = math.tanh %192 : vector<8x128xf32>
    %199 = vector.extract_strided_slice %197 {offsets = [0, 0], sizes = [8, 32], strides = [1, 1]} : vector<8x128xf32> to vector<8x32xf32>
    %200 = vector.extract_strided_slice %197 {offsets = [0, 32], sizes = [8, 32], strides = [1, 1]} : vector<8x128xf32> to vector<8x32xf32>
    %201 = vector.extract_strided_slice %198 {offsets = [0, 64], sizes = [8, 32], strides = [1, 1]} : vector<8x128xf32> to vector<8x32xf32>
    %202 = vector.extract_strided_slice %197 {offsets = [0, 96], sizes = [8, 32], strides = [1, 1]} : vector<8x128xf32> to vector<8x32xf32>
    %203 = arith.mulf %200, %166 : vector<8x32xf32>
    %204 = arith.mulf %199, %201 : vector<8x32xf32>
    %205 = arith.addf %203, %204 : vector<8x32xf32>
    %206 = math.tanh %205 : vector<8x32xf32>
    %207 = arith.mulf %202, %206 : vector<8x32xf32>
    %c5_i32 = arith.constant 5 : i32
    %208 = arith.index_cast %c5_i32 : i32 to index
    %c0_46 = arith.constant 0 : index
    %c0_47 = arith.constant 0 : index
    %209 = vector.load %arg16[%208, %c0_46, %c0_47] : memref<8x8x128xf32, #tpu.memory_space<vmem>>, vector<1x8x128xf32>
    %210 = vector.shape_cast %209 : vector<1x8x128xf32> to vector<8x128xf32>
    %cst_48 = arith.constant dense<0.000000e+00> : vector<8x128xf32>
    %211 = tpu.matmul %188, %9, %cst_48 {dimension_numbers = #tpu.dot_dimension_numbers<[1], [0], [0], [1], [0, 0, 1, 1], [], []>} : vector<8x32xf32>, vector<32x128xf32>, vector<8x128xf32> -> vector<8x128xf32>
    %212 = arith.addf %210, %211 : vector<8x128xf32>
    %213 = arith.negf %212 : vector<8x128xf32>
    %214 = math.exp %213 : vector<8x128xf32>
    %cst_49 = arith.constant 1.000000e+00 : f32
    %215 = vector.broadcast %cst_49 : f32 to vector<8x128xf32>
    %216 = arith.addf %215, %214 : vector<8x128xf32>
    %217 = arith.divf %215, %216 : vector<8x128xf32>
    %218 = math.tanh %212 : vector<8x128xf32>
    %219 = vector.extract_strided_slice %217 {offsets = [0, 0], sizes = [8, 32], strides = [1, 1]} : vector<8x128xf32> to vector<8x32xf32>
    %220 = vector.extract_strided_slice %217 {offsets = [0, 32], sizes = [8, 32], strides = [1, 1]} : vector<8x128xf32> to vector<8x32xf32>
    %221 = vector.extract_strided_slice %218 {offsets = [0, 64], sizes = [8, 32], strides = [1, 1]} : vector<8x128xf32> to vector<8x32xf32>
    %222 = vector.extract_strided_slice %217 {offsets = [0, 96], sizes = [8, 32], strides = [1, 1]} : vector<8x128xf32> to vector<8x32xf32>
    %223 = arith.mulf %220, %186 : vector<8x32xf32>
    %224 = arith.mulf %219, %221 : vector<8x32xf32>
    %225 = arith.addf %223, %224 : vector<8x32xf32>
    %226 = math.tanh %225 : vector<8x32xf32>
    %227 = arith.mulf %222, %226 : vector<8x32xf32>
    %228 = tpu.concatenate %227, %207 in 1 : vector<8x32xf32>, vector<8x32xf32> -> vector<8x64xf32>
    %cst_50 = arith.constant dense<0.000000e+00> : vector<8x128xf32>
    %229 = tpu.matmul %228, %10, %cst_50 {dimension_numbers = #tpu.dot_dimension_numbers<[1], [0], [0], [1], [0, 0, 1, 1], [], []>} : vector<8x64xf32>, vector<64x128xf32>, vector<8x128xf32> -> vector<8x128xf32>
    %230 = vector.broadcast %11 : vector<1x128xf32> to vector<8x128xf32>
    %231 = arith.addf %229, %230 : vector<8x128xf32>
    %232 = arith.negf %231 : vector<8x128xf32>
    %233 = math.exp %232 : vector<8x128xf32>
    %cst_51 = arith.constant 1.000000e+00 : f32
    %234 = vector.broadcast %cst_51 : f32 to vector<8x128xf32>
    %235 = arith.addf %234, %233 : vector<8x128xf32>
    %236 = arith.divf %234, %235 : vector<8x128xf32>
    %237 = math.tanh %231 : vector<8x128xf32>
    %238 = vector.extract_strided_slice %236 {offsets = [0, 0], sizes = [8, 32], strides = [1, 1]} : vector<8x128xf32> to vector<8x32xf32>
    %239 = vector.extract_strided_slice %236 {offsets = [0, 32], sizes = [8, 32], strides = [1, 1]} : vector<8x128xf32> to vector<8x32xf32>
    %240 = vector.extract_strided_slice %237 {offsets = [0, 64], sizes = [8, 32], strides = [1, 1]} : vector<8x128xf32> to vector<8x32xf32>
    %241 = vector.extract_strided_slice %236 {offsets = [0, 96], sizes = [8, 32], strides = [1, 1]} : vector<8x128xf32> to vector<8x32xf32>
    %242 = arith.mulf %239, %205 : vector<8x32xf32>
    %243 = arith.mulf %238, %240 : vector<8x32xf32>
    %244 = arith.addf %242, %243 : vector<8x32xf32>
    %245 = math.tanh %244 : vector<8x32xf32>
    %246 = arith.mulf %241, %245 : vector<8x32xf32>
    %c6_i32 = arith.constant 6 : i32
    %247 = arith.index_cast %c6_i32 : i32 to index
    %c0_52 = arith.constant 0 : index
    %c0_53 = arith.constant 0 : index
    %248 = vector.load %arg16[%247, %c0_52, %c0_53] : memref<8x8x128xf32, #tpu.memory_space<vmem>>, vector<1x8x128xf32>
    %249 = vector.shape_cast %248 : vector<1x8x128xf32> to vector<8x128xf32>
    %cst_54 = arith.constant dense<0.000000e+00> : vector<8x128xf32>
    %250 = tpu.matmul %227, %9, %cst_54 {dimension_numbers = #tpu.dot_dimension_numbers<[1], [0], [0], [1], [0, 0, 1, 1], [], []>} : vector<8x32xf32>, vector<32x128xf32>, vector<8x128xf32> -> vector<8x128xf32>
    %251 = arith.addf %249, %250 : vector<8x128xf32>
    %252 = arith.negf %251 : vector<8x128xf32>
    %253 = math.exp %252 : vector<8x128xf32>
    %cst_55 = arith.constant 1.000000e+00 : f32
    %254 = vector.broadcast %cst_55 : f32 to vector<8x128xf32>
    %255 = arith.addf %254, %253 : vector<8x128xf32>
    %256 = arith.divf %254, %255 : vector<8x128xf32>
    %257 = math.tanh %251 : vector<8x128xf32>
    %258 = vector.extract_strided_slice %256 {offsets = [0, 0], sizes = [8, 32], strides = [1, 1]} : vector<8x128xf32> to vector<8x32xf32>
    %259 = vector.extract_strided_slice %256 {offsets = [0, 32], sizes = [8, 32], strides = [1, 1]} : vector<8x128xf32> to vector<8x32xf32>
    %260 = vector.extract_strided_slice %257 {offsets = [0, 64], sizes = [8, 32], strides = [1, 1]} : vector<8x128xf32> to vector<8x32xf32>
    %261 = vector.extract_strided_slice %256 {offsets = [0, 96], sizes = [8, 32], strides = [1, 1]} : vector<8x128xf32> to vector<8x32xf32>
    %262 = arith.mulf %259, %225 : vector<8x32xf32>
    %263 = arith.mulf %258, %260 : vector<8x32xf32>
    %264 = arith.addf %262, %263 : vector<8x32xf32>
    %265 = math.tanh %264 : vector<8x32xf32>
    %266 = arith.mulf %261, %265 : vector<8x32xf32>
    %267 = tpu.concatenate %266, %246 in 1 : vector<8x32xf32>, vector<8x32xf32> -> vector<8x64xf32>
    %cst_56 = arith.constant dense<0.000000e+00> : vector<8x128xf32>
    %268 = tpu.matmul %267, %10, %cst_56 {dimension_numbers = #tpu.dot_dimension_numbers<[1], [0], [0], [1], [0, 0, 1, 1], [], []>} : vector<8x64xf32>, vector<64x128xf32>, vector<8x128xf32> -> vector<8x128xf32>
    %269 = vector.broadcast %11 : vector<1x128xf32> to vector<8x128xf32>
    %270 = arith.addf %268, %269 : vector<8x128xf32>
    %271 = arith.negf %270 : vector<8x128xf32>
    %272 = math.exp %271 : vector<8x128xf32>
    %cst_57 = arith.constant 1.000000e+00 : f32
    %273 = vector.broadcast %cst_57 : f32 to vector<8x128xf32>
    %274 = arith.addf %273, %272 : vector<8x128xf32>
    %275 = arith.divf %273, %274 : vector<8x128xf32>
    %276 = math.tanh %270 : vector<8x128xf32>
    %277 = vector.extract_strided_slice %275 {offsets = [0, 0], sizes = [8, 32], strides = [1, 1]} : vector<8x128xf32> to vector<8x32xf32>
    %278 = vector.extract_strided_slice %275 {offsets = [0, 32], sizes = [8, 32], strides = [1, 1]} : vector<8x128xf32> to vector<8x32xf32>
    %279 = vector.extract_strided_slice %276 {offsets = [0, 64], sizes = [8, 32], strides = [1, 1]} : vector<8x128xf32> to vector<8x32xf32>
    %280 = vector.extract_strided_slice %275 {offsets = [0, 96], sizes = [8, 32], strides = [1, 1]} : vector<8x128xf32> to vector<8x32xf32>
    %281 = arith.mulf %278, %244 : vector<8x32xf32>
    %282 = arith.mulf %277, %279 : vector<8x32xf32>
    %283 = arith.addf %281, %282 : vector<8x32xf32>
    %284 = math.tanh %283 : vector<8x32xf32>
    %285 = arith.mulf %280, %284 : vector<8x32xf32>
    %c7_i32 = arith.constant 7 : i32
    %286 = arith.index_cast %c7_i32 : i32 to index
    %c0_58 = arith.constant 0 : index
    %c0_59 = arith.constant 0 : index
    %287 = vector.load %arg16[%286, %c0_58, %c0_59] : memref<8x8x128xf32, #tpu.memory_space<vmem>>, vector<1x8x128xf32>
    %288 = vector.shape_cast %287 : vector<1x8x128xf32> to vector<8x128xf32>
    %cst_60 = arith.constant dense<0.000000e+00> : vector<8x128xf32>
    %289 = tpu.matmul %266, %9, %cst_60 {dimension_numbers = #tpu.dot_dimension_numbers<[1], [0], [0], [1], [0, 0, 1, 1], [], []>} : vector<8x32xf32>, vector<32x128xf32>, vector<8x128xf32> -> vector<8x128xf32>
    %290 = arith.addf %288, %289 : vector<8x128xf32>
    %291 = arith.negf %290 : vector<8x128xf32>
    %292 = math.exp %291 : vector<8x128xf32>
    %cst_61 = arith.constant 1.000000e+00 : f32
    %293 = vector.broadcast %cst_61 : f32 to vector<8x128xf32>
    %294 = arith.addf %293, %292 : vector<8x128xf32>
    %295 = arith.divf %293, %294 : vector<8x128xf32>
    %296 = math.tanh %290 : vector<8x128xf32>
    %297 = vector.extract_strided_slice %295 {offsets = [0, 0], sizes = [8, 32], strides = [1, 1]} : vector<8x128xf32> to vector<8x32xf32>
    %298 = vector.extract_strided_slice %295 {offsets = [0, 32], sizes = [8, 32], strides = [1, 1]} : vector<8x128xf32> to vector<8x32xf32>
    %299 = vector.extract_strided_slice %296 {offsets = [0, 64], sizes = [8, 32], strides = [1, 1]} : vector<8x128xf32> to vector<8x32xf32>
    %300 = vector.extract_strided_slice %295 {offsets = [0, 96], sizes = [8, 32], strides = [1, 1]} : vector<8x128xf32> to vector<8x32xf32>
    %301 = arith.mulf %298, %264 : vector<8x32xf32>
    %302 = arith.mulf %297, %299 : vector<8x32xf32>
    %303 = arith.addf %301, %302 : vector<8x32xf32>
    %304 = math.tanh %303 : vector<8x32xf32>
    %305 = arith.mulf %300, %304 : vector<8x32xf32>
    %306 = tpu.concatenate %305, %285 in 1 : vector<8x32xf32>, vector<8x32xf32> -> vector<8x64xf32>
    %cst_62 = arith.constant dense<0.000000e+00> : vector<8x128xf32>
    %307 = tpu.matmul %306, %10, %cst_62 {dimension_numbers = #tpu.dot_dimension_numbers<[1], [0], [0], [1], [0, 0, 1, 1], [], []>} : vector<8x64xf32>, vector<64x128xf32>, vector<8x128xf32> -> vector<8x128xf32>
    %308 = vector.broadcast %11 : vector<1x128xf32> to vector<8x128xf32>
    %309 = arith.addf %307, %308 : vector<8x128xf32>
    %310 = arith.negf %309 : vector<8x128xf32>
    %311 = math.exp %310 : vector<8x128xf32>
    %cst_63 = arith.constant 1.000000e+00 : f32
    %312 = vector.broadcast %cst_63 : f32 to vector<8x128xf32>
    %313 = arith.addf %312, %311 : vector<8x128xf32>
    %314 = arith.divf %312, %313 : vector<8x128xf32>
    %315 = math.tanh %309 : vector<8x128xf32>
    %316 = vector.extract_strided_slice %314 {offsets = [0, 0], sizes = [8, 32], strides = [1, 1]} : vector<8x128xf32> to vector<8x32xf32>
    %317 = vector.extract_strided_slice %314 {offsets = [0, 32], sizes = [8, 32], strides = [1, 1]} : vector<8x128xf32> to vector<8x32xf32>
    %318 = vector.extract_strided_slice %315 {offsets = [0, 64], sizes = [8, 32], strides = [1, 1]} : vector<8x128xf32> to vector<8x32xf32>
    %319 = vector.extract_strided_slice %314 {offsets = [0, 96], sizes = [8, 32], strides = [1, 1]} : vector<8x128xf32> to vector<8x32xf32>
    %320 = arith.mulf %317, %283 : vector<8x32xf32>
    %321 = arith.mulf %316, %318 : vector<8x32xf32>
    %322 = arith.addf %320, %321 : vector<8x32xf32>
    %323 = math.tanh %322 : vector<8x32xf32>
    %324 = arith.mulf %319, %323 : vector<8x32xf32>
    %c8_i32 = arith.constant 8 : i32
    %c0_64 = arith.constant 0 : index
    %c0_65 = arith.constant 0 : index
    %325 = vector.load %arg7[%c0_64, %c0_65] : memref<32x2xf32, #tpu.memory_space<vmem>>, vector<32x2xf32>
    %cst_66 = arith.constant dense<0.000000e+00> : vector<8x2xf32>
    %326 = tpu.matmul %324, %325, %cst_66 {dimension_numbers = #tpu.dot_dimension_numbers<[1], [0], [0], [1], [0, 0, 1, 1], [], []>} : vector<8x32xf32>, vector<32x2xf32>, vector<8x2xf32> -> vector<8x2xf32>
    %c0_67 = arith.constant 0 : index
    %c0_68 = arith.constant 0 : index
    %327 = vector.load %arg8[%c0_67, %c0_68] : memref<1x2xf32, #tpu.memory_space<vmem>>, vector<1x2xf32>
    %328 = vector.broadcast %327 : vector<1x2xf32> to vector<8x2xf32>
    %329 = arith.addf %326, %328 : vector<8x2xf32>
    %330 = arith.negf %329 : vector<8x2xf32>
    %331 = math.exp %330 : vector<8x2xf32>
    %cst_69 = arith.constant 1.000000e+00 : f32
    %332 = vector.broadcast %cst_69 : f32 to vector<8x2xf32>
    %333 = arith.addf %332, %331 : vector<8x2xf32>
    %334 = arith.divf %332, %333 : vector<8x2xf32>
    %c0_70 = arith.constant 0 : index
    %c0_71 = arith.constant 0 : index
    %335 = vector.load %arg1[%c0_70, %c0_71] : memref<8x2xf32, #tpu.memory_space<vmem>>, vector<8x2xf32>
    %336 = tpu.concatenate %335, %324 in 1 : vector<8x2xf32>, vector<8x32xf32> -> vector<8x34xf32>
    %cst_72 = arith.constant dense<0.000000e+00> : vector<34xf32>
    %337 = vector.multi_reduction <add>, %336, %cst_72 [0] : vector<8x34xf32> to vector<34xf32>
    %338 = vector.shape_cast %337 : vector<34xf32> to vector<1x34xf32>
    %cst_73 = arith.constant 8.000000e+00 : f32
    %339 = vector.broadcast %cst_73 : f32 to vector<1x34xf32>
    %340 = arith.divf %338, %339 : vector<1x34xf32>
    %341 = vector.broadcast %340 : vector<1x34xf32> to vector<8x34xf32>
    %342 = arith.subf %336, %341 : vector<8x34xf32>
    %343 = vector.broadcast %340 : vector<1x34xf32> to vector<8x34xf32>
    %344 = arith.subf %336, %343 : vector<8x34xf32>
    %345 = arith.mulf %342, %344 : vector<8x34xf32>
    %cst_74 = arith.constant dense<0.000000e+00> : vector<34xf32>
    %346 = vector.multi_reduction <add>, %345, %cst_74 [0] : vector<8x34xf32> to vector<34xf32>
    %347 = vector.shape_cast %346 : vector<34xf32> to vector<1x34xf32>
    %cst_75 = arith.constant 8.000000e+00 : f32
    %348 = vector.broadcast %cst_75 : f32 to vector<1x34xf32>
    %349 = arith.divf %347, %348 : vector<1x34xf32>
    %350 = vector.broadcast %340 : vector<1x34xf32> to vector<8x34xf32>
    %351 = arith.subf %336, %350 : vector<8x34xf32>
    %cst_76 = arith.constant 9.99999974E-6 : f32
    %352 = vector.broadcast %cst_76 : f32 to vector<1x34xf32>
    %353 = arith.addf %349, %352 : vector<1x34xf32>
    %354 = math.rsqrt %353 : vector<1x34xf32>
    %355 = vector.broadcast %354 : vector<1x34xf32> to vector<8x34xf32>
    %356 = arith.mulf %351, %355 : vector<8x34xf32>
    %c0_77 = arith.constant 0 : index
    %c0_78 = arith.constant 0 : index
    %357 = vector.load %arg9[%c0_77, %c0_78] : memref<1x34xf32, #tpu.memory_space<vmem>>, vector<1x34xf32>
    %358 = vector.broadcast %357 : vector<1x34xf32> to vector<8x34xf32>
    %359 = arith.mulf %356, %358 : vector<8x34xf32>
    %c0_79 = arith.constant 0 : index
    %c0_80 = arith.constant 0 : index
    %360 = vector.load %arg10[%c0_79, %c0_80] : memref<1x34xf32, #tpu.memory_space<vmem>>, vector<1x34xf32>
    %361 = vector.broadcast %360 : vector<1x34xf32> to vector<8x34xf32>
    %362 = arith.addf %359, %361 : vector<8x34xf32>
    %c0_81 = arith.constant 0 : index
    %c0_82 = arith.constant 0 : index
    %363 = vector.load %arg11[%c0_81, %c0_82] : memref<34x32xf32, #tpu.memory_space<vmem>>, vector<34x32xf32>
    %cst_83 = arith.constant dense<0.000000e+00> : vector<8x32xf32>
    %364 = tpu.matmul %362, %363, %cst_83 {dimension_numbers = #tpu.dot_dimension_numbers<[1], [0], [0], [1], [0, 0, 1, 1], [], []>} : vector<8x34xf32>, vector<34x32xf32>, vector<8x32xf32> -> vector<8x32xf32>
    %c0_84 = arith.constant 0 : index
    %c0_85 = arith.constant 0 : index
    %365 = vector.load %arg12[%c0_84, %c0_85] : memref<1x32xf32, #tpu.memory_space<vmem>>, vector<1x32xf32>
    %366 = vector.broadcast %365 : vector<1x32xf32> to vector<8x32xf32>
    %367 = arith.addf %364, %366 : vector<8x32xf32>
    %cst_86 = arith.constant 0.000000e+00 : f32
    %368 = vector.broadcast %cst_86 : f32 to vector<8x32xf32>
    %369 = arith.maximumf %367, %368 : vector<8x32xf32>
    %c0_87 = arith.constant 0 : index
    %c0_88 = arith.constant 0 : index
    %370 = vector.load %arg13[%c0_87, %c0_88] : memref<32x2xf32, #tpu.memory_space<vmem>>, vector<32x2xf32>
    %cst_89 = arith.constant dense<0.000000e+00> : vector<8x2xf32>
    %371 = tpu.matmul %369, %370, %cst_89 {dimension_numbers = #tpu.dot_dimension_numbers<[1], [0], [0], [1], [0, 0, 1, 1], [], []>} : vector<8x32xf32>, vector<32x2xf32>, vector<8x2xf32> -> vector<8x2xf32>
    %c0_90 = arith.constant 0 : index
    %c0_91 = arith.constant 0 : index
    %372 = vector.load %arg14[%c0_90, %c0_91] : memref<1x2xf32, #tpu.memory_space<vmem>>, vector<1x2xf32>
    %373 = vector.broadcast %372 : vector<1x2xf32> to vector<8x2xf32>
    %374 = arith.addf %371, %373 : vector<8x2xf32>
    %375 = arith.negf %374 : vector<8x2xf32>
    %376 = math.exp %375 : vector<8x2xf32>
    %cst_92 = arith.constant 1.000000e+00 : f32
    %377 = vector.broadcast %cst_92 : f32 to vector<8x2xf32>
    %378 = arith.addf %377, %376 : vector<8x2xf32>
    %379 = arith.divf %377, %378 : vector<8x2xf32>
    %380 = tpu.concatenate %379, %334 in 1 : vector<8x2xf32>, vector<8x2xf32> -> vector<8x4xf32>
    %c0_93 = arith.constant 0 : index
    %c0_94 = arith.constant 0 : index
    %381 = vector.load %arg15[%c0_93, %c0_94] : memref<8x4xf32, #tpu.memory_space<vmem>>, vector<8x4xf32>
    tpu.vector_store %arg15[%c0_93, %c0_94], %380 {strides = array<i32>} : memref<8x4xf32, #tpu.memory_space<vmem>>, vector<8x4xf32>,
    return
  }
}

</mosaic_0001>

<llo_original>
// kernel: devmap_lstm_forward.1
$region0: #{devmap_lstm_forward.1}
  #allocation0 [shape = 'u32[]', space=smem, size = 0x4, offset = 0x4, fixed_abs, tag = 'smem constant byte address 0x4 - core index']
  #allocation1 [shape = 'u32[144,128]{1,0:T(1,128)}', space=vmem, size = 0x12000, scoped, tag = 'internal scratch']
  #allocation2 [shape = 'f32[8,8,128]{2,1,0:T(8,128)}', space=vmem, size = 0x8000, scoped, tag = 'scratch operand']
  %s0 = inlined_call_operand.vmem [shape: f32[8,8,32], index: 0, kind: input, shape index: {}]
  %s1 = inlined_call_operand.vmem [shape: f32[8,2], index: 1, kind: input, shape index: {}]
  %s2 = inlined_call_operand.vmem [shape: f32[32,128], index: 2, kind: input, shape index: {}]
  %s3 = inlined_call_operand.vmem [shape: f32[32,128], index: 3, kind: input, shape index: {}]
  %s4 = inlined_call_operand.vmem [shape: f32[1,128], index: 4, kind: input, shape index: {}]
  %s5 = inlined_call_operand.vmem [shape: f32[64,128], index: 5, kind: input, shape index: {}]
  %s6 = inlined_call_operand.vmem [shape: f32[1,128], index: 6, kind: input, shape index: {}]
  %s7 = inlined_call_operand.vmem [shape: f32[32,2], index: 7, kind: input, shape index: {}]
  %s8 = inlined_call_operand.vmem [shape: f32[1,2], index: 8, kind: input, shape index: {}]
  %s9 = inlined_call_operand.vmem [shape: f32[1,34], index: 9, kind: input, shape index: {}]
  %s10 = inlined_call_operand.vmem [shape: f32[1,34], index: 10, kind: input, shape index: {}]
  %s11 = inlined_call_operand.vmem [shape: f32[34,32], index: 11, kind: input, shape index: {}]
  %s12 = inlined_call_operand.vmem [shape: f32[1,32], index: 12, kind: input, shape index: {}]
  %s13 = inlined_call_operand.vmem [shape: f32[32,2], index: 13, kind: input, shape index: {}]
  %s14 = inlined_call_operand.vmem [shape: f32[1,2], index: 14, kind: input, shape index: {}]
  %s15 = inlined_call_operand.vmem [shape: f32[8,4], index: 15, kind: output, shape index: {}]
  %s16 = sld [smem:[#allocation0]]
  $region70: #{devmap_lstm_forward.1} parent=0
    _
  %s18 = ssub.s32 1, %s16
  %s19 = scalar_select 0, %s18, %s16
  // Predicated region
  $region2: #{devmap_lstm_forward.1} parent=0 // pred_check
    _
  $region3: #{devmap_lstm_forward.1} parent=0 // pred_check_branch
    %21 = sbr.rel (0) target = $region5
  $region4: #{devmap_lstm_forward.1} parent=0 // pred_region
    _
  $region5: #{devmap_lstm_forward.1} parent=0 // pred_fallthru
    _
  // Predicated region
  $region6: #{devmap_lstm_forward.1} parent=0 // pred_check
    _
  $region7: #{devmap_lstm_forward.1} parent=0 // pred_check_branch
    %23 = sbr.rel (0) target = $region9
  $region8: #{devmap_lstm_forward.1} parent=0 // pred_region
    _
  $region9: #{devmap_lstm_forward.1} parent=0 // pred_fallthru
    _
  // Predicated region
  $region10: #{devmap_lstm_forward.1} parent=0 // pred_check
    _
  $region11: #{devmap_lstm_forward.1} parent=0 // pred_check_branch
    %25 = sbr.rel (0) target = $region13
  $region12: #{devmap_lstm_forward.1} parent=0 // pred_region
    _
  $region13: #{devmap_lstm_forward.1} parent=0 // pred_fallthru
    _
  // Predicated region
  $region14: #{devmap_lstm_forward.1} parent=0 // pred_check
    _
  $region15: #{devmap_lstm_forward.1} parent=0 // pred_check_branch
    %27 = sbr.rel (0) target = $region17
  $region16: #{devmap_lstm_forward.1} parent=0 // pred_region
    _
  $region17: #{devmap_lstm_forward.1} parent=0 // pred_fallthru
    _
  // Predicated region
  $region18: #{devmap_lstm_forward.1} parent=0 // pred_check
    _
  $region19: #{devmap_lstm_forward.1} parent=0 // pred_check_branch
    %29 = sbr.rel (0) target = $region21
  $region20: #{devmap_lstm_forward.1} parent=0 // pred_region
    _
  $region21: #{devmap_lstm_forward.1} parent=0 // pred_fallthru
    _
  // Predicated region
  $region22: #{devmap_lstm_forward.1} parent=0 // pred_check
    _
  $region23: #{devmap_lstm_forward.1} parent=0 // pred_check_branch
    %31 = sbr.rel (0) target = $region25
  $region24: #{devmap_lstm_forward.1} parent=0 // pred_region
    _
  $region25: #{devmap_lstm_forward.1} parent=0 // pred_fallthru
    _
  // Predicated region
  $region26: #{devmap_lstm_forward.1} parent=0 // pred_check
    _
  $region27: #{devmap_lstm_forward.1} parent=0 // pred_check_branch
    %33 = sbr.rel (0) target = $region29
  $region28: #{devmap_lstm_forward.1} parent=0 // pred_region
    _
  $region29: #{devmap_lstm_forward.1} parent=0 // pred_fallthru
    _
  // Predicated region
  $region30: #{devmap_lstm_forward.1} parent=0 // pred_check
    _
  $region31: #{devmap_lstm_forward.1} parent=0 // pred_check_branch
    %35 = sbr.rel (0) target = $region33
  $region32: #{devmap_lstm_forward.1} parent=0 // pred_region
    _
  $region33: #{devmap_lstm_forward.1} parent=0 // pred_fallthru
    _
  // Predicated region
  $region34: #{devmap_lstm_forward.1} parent=0 // pred_check
    _
  $region35: #{devmap_lstm_forward.1} parent=0 // pred_check_branch
    %37 = sbr.rel (0) target = $region37
  $region36: #{devmap_lstm_forward.1} parent=0 // pred_region
    _
  $region37: #{devmap_lstm_forward.1} parent=0 // pred_fallthru
    _
  // Predicated region
  $region38: #{devmap_lstm_forward.1} parent=0 // pred_check
    _
  $region39: #{devmap_lstm_forward.1} parent=0 // pred_check_branch
    %39 = sbr.rel (0) target = $region41
  $region40: #{devmap_lstm_forward.1} parent=0 // pred_region
    _
  $region41: #{devmap_lstm_forward.1} parent=0 // pred_fallthru
    _
  // Predicated region
  $region42: #{devmap_lstm_forward.1} parent=0 // pred_check
    _
  $region43: #{devmap_lstm_forward.1} parent=0 // pred_check_branch
    %41 = sbr.rel (0) target = $region45
  $region44: #{devmap_lstm_forward.1} parent=0 // pred_region
    _
  $region45: #{devmap_lstm_forward.1} parent=0 // pred_fallthru
    _
  // Predicated region
  $region46: #{devmap_lstm_forward.1} parent=0 // pred_check
    _
  $region47: #{devmap_lstm_forward.1} parent=0 // pred_check_branch
    %43 = sbr.rel (0) target = $region49
  $region48: #{devmap_lstm_forward.1} parent=0 // pred_region
    _
  $region49: #{devmap_lstm_forward.1} parent=0 // pred_fallthru
    _
  // Predicated region
  $region50: #{devmap_lstm_forward.1} parent=0 // pred_check
    _
  $region51: #{devmap_lstm_forward.1} parent=0 // pred_check_branch
    %45 = sbr.rel (0) target = $region53
  $region52: #{devmap_lstm_forward.1} parent=0 // pred_region
    _
  $region53: #{devmap_lstm_forward.1} parent=0 // pred_fallthru
    _
  // Predicated region
  $region54: #{devmap_lstm_forward.1} parent=0 // pred_check
    _
  $region55: #{devmap_lstm_forward.1} parent=0 // pred_check_branch
    %47 = sbr.rel (0) target = $region57
  $region56: #{devmap_lstm_forward.1} parent=0 // pred_region
    _
  $region57: #{devmap_lstm_forward.1} parent=0 // pred_fallthru
    _
  // Predicated region
  $region58: #{devmap_lstm_forward.1} parent=0 // pred_check
    _
  $region59: #{devmap_lstm_forward.1} parent=0 // pred_check_branch
    %49 = sbr.rel (0) target = $region61
  $region60: #{devmap_lstm_forward.1} parent=0 // pred_region
    _
  $region61: #{devmap_lstm_forward.1} parent=0 // pred_fallthru
    _
  %v50 = vld [vmem:[%s0] sm:$0xff]
  %v51 = vld [vmem:[%s0 + $0x8] sm:$0xff]
  %v52 = vld [vmem:[%s0 + $0x10] sm:$0xff]
  %v53 = vld [vmem:[%s0 + $0x18] sm:$0xff]
  %v54 = vld [vmem:[%s0 + $0x20] sm:$0xff]
  %v55 = vld [vmem:[%s0 + $0x28] sm:$0xff]
  %v56 = vld [vmem:[%s0 + $0x30] sm:$0xff]
  %v57 = vld [vmem:[%s0 + $0x38] sm:$0xff]
  %v58 = vld [vmem:[%s2] sm:$0xff]
  %v59 = vld [vmem:[%s2 + $0x8] sm:$0xff]
  %v60 = vld [vmem:[%s2 + $0x10] sm:$0xff]
  %v61 = vld [vmem:[%s2 + $0x18] sm:$0xff]
  %v62 = vld [vmem:[%s4] sm:$0x1]
  %v64 = vlaneseq
  %v65 = vshrl.u32 %v64, 7
  %v66 = vsub.s32 0, %v65
  %v67 = vrot.slane %v62, %v66
  %vm69 = vcmask 261120
  %v71 = vsel %vm69, %v50, 0
  %v74 = vsel %vm69, %v51, 0
  %v77 = vsel %vm69, %v52, 0
  %v80 = vsel %vm69, %v53, 0
  %v83 = vsel %vm69, %v54, 0
  %v86 = vsel %vm69, %v55, 0
  %v89 = vsel %vm69, %v56, 0
  %v92 = vsel %vm69, %v57, 0
  %94 = vmatprep.subr.mxu0 0.0
  %95 = vmatpush1.msra.mxu0 0.0
  %96 = vmatprep.subr.mxu0 0.0
  %97 = vmatpush1.msra.mxu0 0.0
  %98 = vmatprep.subr.mxu0 0.0
  %99 = vmatpush1.msra.mxu0 0.0
  %100 = vmatprep.subr.mxu0 0.0
  %101 = vmatpush1.msra.mxu0 0.0
  %102 = vmatprep.subr.mxu0 0.0
  %103 = vmatpush1.msra.mxu0 0.0
  %104 = vmatprep.subr.mxu0 0.0
  %105 = vmatpush1.msra.mxu0 0.0
  %106 = vmatprep.subr.mxu0 0.0
  %107 = vmatpush1.msra.mxu0 0.0
  %108 = vmatprep.subr.mxu0 0.0
  %109 = vmatpush1.msra.mxu0 0.0
  %110 = vmatprep.subr.mxu0 0.0
  %111 = vmatpush1.msra.mxu0 0.0
  %112 = vmatprep.subr.mxu0 0.0
  %113 = vmatpush1.msra.mxu0 0.0
  %114 = vmatprep.subr.mxu0 0.0
  %115 = vmatpush1.msra.mxu0 0.0
  %116 = vmatprep.subr.mxu0 0.0
  %117 = vmatpush1.msra.mxu0 0.0
  %118 = vmatprep.subr.mxu0 0.0
  %119 = vmatpush1.msra.mxu0 %v61
  %120 = vmatprep.subr.mxu0 0.0
  %121 = vmatpush1.msra.mxu0 %v60
  %122 = vmatprep.subr.mxu0 0.0
  %123 = vmatpush1.msra.mxu0 %v59
  %124 = vmatprep.subr.mxu0 0.0
  %125 = vmatpush1.msra.mxu0 %v58
  %126 = vmatprep.subr.mxu0 0.0
  %127 = vmatpush2.msra.mxu0 0.0
  %128 = vmatprep.subr.mxu0 0.0
  %129 = vmatpush2.msra.mxu0 0.0
  %130 = vmatprep.subr.mxu0 0.0
  %131 = vmatpush2.msra.mxu0 0.0
  %132 = vmatprep.subr.mxu0 0.0
  %133 = vmatpush2.msra.mxu0 0.0
  %134 = vmatprep.subr.mxu0 0.0
  %135 = vmatpush2.msra.mxu0 0.0
  %136 = vmatprep.subr.mxu0 0.0
  %137 = vmatpush2.msra.mxu0 0.0
  %138 = vmatprep.subr.mxu0 0.0
  %139 = vmatpush2.msra.mxu0 0.0
  %140 = vmatprep.subr.mxu0 0.0
  %141 = vmatpush2.msra.mxu0 0.0
  %142 = vmatprep.subr.mxu0 0.0
  %143 = vmatpush2.msra.mxu0 0.0
  %144 = vmatprep.subr.mxu0 0.0
  %145 = vmatpush2.msra.mxu0 0.0
  %146 = vmatprep.subr.mxu0 0.0
  %147 = vmatpush2.msra.mxu0 0.0
  %148 = vmatprep.subr.mxu0 0.0
  %149 = vmatpush2.msra.mxu0 0.0
  %150 = vmatprep.subr.mxu0 0.0
  %151 = vmatpush2.msra.mxu0 0.0
  %152 = vmatprep.subr.mxu0 0.0
  %153 = vmatpush2.msra.mxu0 0.0
  %154 = vmatprep.subr.mxu0 0.0
  %155 = vmatpush2.msra.mxu0 0.0
  %156 = vmatprep.subr.mxu0 0.0
  %157 = vmatpush2.msra.mxu0 0.0
  %158 = vmatprep.mubr.f32.mxu0 0.0
  %159 = vmatmul.mubr.f32.gmra.mxu0 %v71
  %v160 = vpop.f32.mrf.mxu0
  %v161 = vadd.f32 %v67, %v160
  %v162 = vpop.f32.mrf.mxu0
  %163 = vmatprep.mubr.f32.mxu0 0.0
  %164 = vmatmul.mubr.f32.gmra.mxu0 %v74
  %v165 = vpop.f32.mrf.mxu0
  %v166 = vadd.f32 %v67, %v165
  %v167 = vpop.f32.mrf.mxu0
  %168 = vmatprep.mubr.f32.mxu0 0.0
  %169 = vmatmul.mubr.f32.gmra.mxu0 %v77
  %v170 = vpop.f32.mrf.mxu0
  %v171 = vadd.f32 %v67, %v170
  %v172 = vpop.f32.mrf.mxu0
  %173 = vmatprep.mubr.f32.mxu0 0.0
  %174 = vmatmul.mubr.f32.gmra.mxu0 %v80
  %v175 = vpop.f32.mrf.mxu0
  %v176 = vadd.f32 %v67, %v175
  %v177 = vpop.f32.mrf.mxu0
  %178 = vmatprep.mubr.f32.mxu0 0.0
  %179 = vmatmul.mubr.f32.gmra.mxu0 %v83
  %v180 = vpop.f32.mrf.mxu0
  %v181 = vadd.f32 %v67, %v180
  %v182 = vpop.f32.mrf.mxu0
  %183 = vmatprep.mubr.f32.mxu0 0.0
  %184 = vmatmul.mubr.f32.gmra.mxu0 %v86
  %v185 = vpop.f32.mrf.mxu0
  %v186 = vadd.f32 %v67, %v185
  %v187 = vpop.f32.mrf.mxu0
  %188 = vmatprep.mubr.f32.mxu0 0.0
  %189 = vmatmul.mubr.f32.gmra.mxu0 %v89
  %v190 = vpop.f32.mrf.mxu0
  %v191 = vadd.f32 %v67, %v190
  %v192 = vpop.f32.mrf.mxu0
  %193 = vmatprep.mubr.f32.mxu0 0.0
  %194 = vmatmul.mubr.f32.gmra.mxu0 %v92
  %v195 = vpop.f32.mrf.mxu0
  %v196 = vadd.f32 %v67, %v195
  %v197 = vpop.f32.mrf.mxu0
  %198 = vdwg.mxu0
  %199 = vst [vmem:[#allocation2] sm:$0xff] %v161
  %200 = vst [vmem:[#allocation2 + $0x8] sm:$0xff] %v166
  %201 = vst [vmem:[#allocation2 + $0x10] sm:$0xff] %v171
  %202 = vst [vmem:[#allocation2 + $0x18] sm:$0xff] %v176
  %203 = vst [vmem:[#allocation2 + $0x20] sm:$0xff] %v181
  %204 = vst [vmem:[#allocation2 + $0x28] sm:$0xff] %v186
  %205 = vst [vmem:[#allocation2 + $0x30] sm:$0xff] %v191
  %206 = vst [vmem:[#allocation2 + $0x38] sm:$0xff] %v196
  %v207 = vld [vmem:[%s3] sm:$0xff]
  %v208 = vld [vmem:[%s3 + $0x8] sm:$0xff]
  %v209 = vld [vmem:[%s3 + $0x10] sm:$0xff]
  %v210 = vld [vmem:[%s3 + $0x18] sm:$0xff]
  %v211 = vld [vmem:[%s5] sm:$0xff]
  %v212 = vld [vmem:[%s5 + $0x8] sm:$0xff]
  %v213 = vld [vmem:[%s5 + $0x10] sm:$0xff]
  %v214 = vld [vmem:[%s5 + $0x18] sm:$0xff]
  %v215 = vld [vmem:[%s5 + $0x20] sm:$0xff]
  %v216 = vld [vmem:[%s5 + $0x28] sm:$0xff]
  %v217 = vld [vmem:[%s5 + $0x30] sm:$0xff]
  %v218 = vld [vmem:[%s5 + $0x38] sm:$0xff]
  %v219 = vld [vmem:[%s6] sm:$0x1]
  %v220 = vld [vmem:[#allocation2] sm:$0xff]
  %v222 = vsel %vm69, 0.0, 0
  %224 = vmatprep.subr.mxu0 0.0
  %225 = vmatpush1.msra.mxu0 0.0
  %226 = vmatprep.subr.mxu0 0.0
  %227 = vmatpush1.msra.mxu0 0.0
  %228 = vmatprep.subr.mxu0 0.0
  %229 = vmatpush1.msra.mxu0 0.0
  %230 = vmatprep.subr.mxu0 0.0
  %231 = vmatpush1.msra.mxu0 0.0
  %232 = vmatprep.subr.mxu0 0.0
  %233 = vmatpush1.msra.mxu0 0.0
  %234 = vmatprep.subr.mxu0 0.0
  %235 = vmatpush1.msra.mxu0 0.0
  %236 = vmatprep.subr.mxu0 0.0
  %237 = vmatpush1.msra.mxu0 0.0
  %238 = vmatprep.subr.mxu0 0.0
  %239 = vmatpush1.msra.mxu0 0.0
  %240 = vmatprep.subr.mxu0 0.0
  %241 = vmatpush1.msra.mxu0 0.0
  %242 = vmatprep.subr.mxu0 0.0
  %243 = vmatpush1.msra.mxu0 0.0
  %244 = vmatprep.subr.mxu0 0.0
  %245 = vmatpush1.msra.mxu0 0.0
  %246 = vmatprep.subr.mxu0 0.0
  %247 = vmatpush1.msra.mxu0 0.0
  %248 = vmatprep.subr.mxu0 0.0
  %249 = vmatpush1.msra.mxu0 %v210
  %250 = vmatprep.subr.mxu0 0.0
  %251 = vmatpush1.msra.mxu0 %v209
  %252 = vmatprep.subr.mxu0 0.0
  %253 = vmatpush1.msra.mxu0 %v208
  %254 = vmatprep.subr.mxu0 0.0
  %255 = vmatpush1.msra.mxu0 %v207
  %256 = vmatprep.subr.mxu0 0.0
  %257 = vmatpush2.msra.mxu0 0.0
  %258 = vmatprep.subr.mxu0 0.0
  %259 = vmatpush2.msra.mxu0 0.0
  %260 = vmatprep.subr.mxu0 0.0
  %261 = vmatpush2.msra.mxu0 0.0
  %262 = vmatprep.subr.mxu0 0.0
  %263 = vmatpush2.msra.mxu0 0.0
  %264 = vmatprep.subr.mxu0 0.0
  %265 = vmatpush2.msra.mxu0 0.0
  %266 = vmatprep.subr.mxu0 0.0
  %267 = vmatpush2.msra.mxu0 0.0
  %268 = vmatprep.subr.mxu0 0.0
  %269 = vmatpush2.msra.mxu0 0.0
  %270 = vmatprep.subr.mxu0 0.0
  %271 = vmatpush2.msra.mxu0 0.0
  %272 = vmatprep.subr.mxu0 0.0
  %273 = vmatpush2.msra.mxu0 0.0
  %274 = vmatprep.subr.mxu0 0.0
  %275 = vmatpush2.msra.mxu0 0.0
  %276 = vmatprep.subr.mxu0 0.0
  %277 = vmatpush2.msra.mxu0 0.0
  %278 = vmatprep.subr.mxu0 0.0
  %279 = vmatpush2.msra.mxu0 0.0
  %280 = vmatprep.subr.mxu0 0.0
  %281 = vmatpush2.msra.mxu0 0.0
  %282 = vmatprep.subr.mxu0 0.0
  %283 = vmatpush2.msra.mxu0 0.0
  %284 = vmatprep.subr.mxu0 0.0
  %285 = vmatpush2.msra.mxu0 0.0
  %286 = vmatprep.subr.mxu0 0.0
  %287 = vmatpush2.msra.mxu0 0.0
  %288 = vmatprep.mubr.f32.mxu0 0.0
  %289 = vmatmul.mubr.f32.gmra.mxu0 %v222
  %v290 = vpop.f32.mrf.mxu0
  %v291 = vadd.f32 0.0, %v290
  %v292 = vpop.f32.mrf.mxu0
  %293 = vdwg.mxu0
  %v294 = vadd.f32 %v220, %v291
  %v295 = vxor.u32 %v294, 2147483648
  %v296 = vmul.f32 %v295, 1.442695
  %v297 = vpow.pop %v296
  %v298 = vadd.f32 %v297, 1.0
  %v299 = vrcp.pop %v298
  %v300 = vmul.f32 1.0, %v299
  %v301 = vtanh.pop %v294
  %v302 = vmul.f32 %v300, 0.0
  %304 = vrot.lane.b32.xlu0 %v301, 64
  %v305 = vpop.permute.xlu0 %304
  %v307 = vmul.f32 %v300, %v305
  %309 = vrot.lane.b32.xlu0 %v307, 32
  %v310 = vpop.permute.xlu0 %309
  %v312 = vadd.f32 %v302, %v310
  %v313 = vtanh.pop %v312
  %315 = vrot.lane.b32.xlu0 %v313, 64
  %v316 = vpop.permute.xlu0 %315
  %v318 = vmul.f32 %v300, %v316
  %320 = vrot.lane.b32.xlu0 %v318, 32
  %v321 = vpop.permute.xlu0 %320
  %v323 = vsel %vm69, %v321, 0.0
  %v325 = vlaneseq
  %v326 = vshrl.u32 %v325, 7
  %v327 = vsub.s32 0, %v326
  %v328 = vrot.slane %v219, %v327
  %vm330 = vcmask 523264
  %v332 = vsel %vm330, %v323, 0
  %334 = vmatprep.subr.mxu0 0.0
  %335 = vmatpush1.msra.mxu0 0.0
  %336 = vmatprep.subr.mxu0 0.0
  %337 = vmatpush1.msra.mxu0 0.0
  %338 = vmatprep.subr.mxu0 0.0
  %339 = vmatpush1.msra.mxu0 0.0
  %340 = vmatprep.subr.mxu0 0.0
  %341 = vmatpush1.msra.mxu0 0.0
  %342 = vmatprep.subr.mxu0 0.0
  %343 = vmatpush1.msra.mxu0 0.0
  %344 = vmatprep.subr.mxu0 0.0
  %345 = vmatpush1.msra.mxu0 0.0
  %346 = vmatprep.subr.mxu0 0.0
  %347 = vmatpush1.msra.mxu0 0.0
  %348 = vmatprep.subr.mxu0 0.0
  %349 = vmatpush1.msra.mxu0 0.0
  %350 = vmatprep.subr.mxu0 0.0
  %351 = vmatpush1.msra.mxu0 %v218
  %352 = vmatprep.subr.mxu0 0.0
  %353 = vmatpush1.msra.mxu0 %v217
  %354 = vmatprep.subr.mxu0 0.0
  %355 = vmatpush1.msra.mxu0 %v216
  %356 = vmatprep.subr.mxu0 0.0
  %357 = vmatpush1.msra.mxu0 %v215
  %358 = vmatprep.subr.mxu0 0.0
  %359 = vmatpush1.msra.mxu0 %v214
  %360 = vmatprep.subr.mxu0 0.0
  %361 = vmatpush1.msra.mxu0 %v213
  %362 = vmatprep.subr.mxu0 0.0
  %363 = vmatpush1.msra.mxu0 %v212
  %364 = vmatprep.subr.mxu0 0.0
  %365 = vmatpush1.msra.mxu0 %v211
  %366 = vmatprep.subr.mxu0 0.0
  %367 = vmatpush2.msra.mxu0 0.0
  %368 = vmatprep.subr.mxu0 0.0
  %369 = vmatpush2.msra.mxu0 0.0
  %370 = vmatprep.subr.mxu0 0.0
  %371 = vmatpush2.msra.mxu0 0.0
  %372 = vmatprep.subr.mxu0 0.0
  %373 = vmatpush2.msra.mxu0 0.0
  %374 = vmatprep.subr.mxu0 0.0
  %375 = vmatpush2.msra.mxu0 0.0
  %376 = vmatprep.subr.mxu0 0.0
  %377 = vmatpush2.msra.mxu0 0.0
  %378 = vmatprep.subr.mxu0 0.0
  %379 = vmatpush2.msra.mxu0 0.0
  %380 = vmatprep.subr.mxu0 0.0
  %381 = vmatpush2.msra.mxu0 0.0
  %382 = vmatprep.subr.mxu0 0.0
  %383 = vmatpush2.msra.mxu0 0.0
  %384 = vmatprep.subr.mxu0 0.0
  %385 = vmatpush2.msra.mxu0 0.0
  %386 = vmatprep.subr.mxu0 0.0
  %387 = vmatpush2.msra.mxu0 0.0
  %388 = vmatprep.subr.mxu0 0.0
  %389 = vmatpush2.msra.mxu0 0.0
  %390 = vmatprep.subr.mxu0 0.0
  %391 = vmatpush2.msra.mxu0 0.0
  %392 = vmatprep.subr.mxu0 0.0
  %393 = vmatpush2.msra.mxu0 0.0
  %394 = vmatprep.subr.mxu0 0.0
  %395 = vmatpush2.msra.mxu0 0.0
  %396 = vmatprep.subr.mxu0 0.0
  %397 = vmatpush2.msra.mxu0 0.0
  %398 = vmatprep.mubr.f32.mxu0 0.0
  %399 = vmatmul.mubr.f32.gmra.mxu0 %v332
  %v400 = vpop.f32.mrf.mxu0
  %v401 = vadd.f32 %v328, %v400
  %v402 = vpop.f32.mrf.mxu0
  %403 = vdwg.mxu0
  %v404 = vxor.u32 %v401, 2147483648
  %v405 = vmul.f32 %v404, 1.442695
  %v406 = vpow.pop %v405
  %v407 = vadd.f32 %v406, 1.0
  %v408 = vrcp.pop %v407
  %v409 = vmul.f32 1.0, %v408
  %v410 = vtanh.pop %v401
  %v411 = vmul.f32 %v409, 0.0
  %413 = vrot.lane.b32.xlu0 %v410, 64
  %v414 = vpop.permute.xlu0 %413
  %v416 = vmul.f32 %v409, %v414
  %418 = vrot.lane.b32.xlu0 %v416, 32
  %v419 = vpop.permute.xlu0 %418
  %v421 = vadd.f32 %v411, %v419
  %v422 = vtanh.pop %v421
  %424 = vrot.lane.b32.xlu0 %v422, 64
  %v425 = vpop.permute.xlu0 %424
  %v427 = vmul.f32 %v409, %v425
  %s428 = scalar_lea.vmem [#allocation2], 8
  %v429 = vld [vmem:[%s428] sm:$0xff]
  %v430 = vsel %vm69, %v321, 0
  %432 = vmatprep.subr.mxu0 0.0
  %433 = vmatpush1.msra.mxu0 0.0
  %434 = vmatprep.subr.mxu0 0.0
  %435 = vmatpush1.msra.mxu0 0.0
  %436 = vmatprep.subr.mxu0 0.0
  %437 = vmatpush1.msra.mxu0 0.0
  %438 = vmatprep.subr.mxu0 0.0
  %439 = vmatpush1.msra.mxu0 0.0
  %440 = vmatprep.subr.mxu0 0.0
  %441 = vmatpush1.msra.mxu0 0.0
  %442 = vmatprep.subr.mxu0 0.0
  %443 = vmatpush1.msra.mxu0 0.0
  %444 = vmatprep.subr.mxu0 0.0
  %445 = vmatpush1.msra.mxu0 0.0
  %446 = vmatprep.subr.mxu0 0.0
  %447 = vmatpush1.msra.mxu0 0.0
  %448 = vmatprep.subr.mxu0 0.0
  %449 = vmatpush1.msra.mxu0 0.0
  %450 = vmatprep.subr.mxu0 0.0
  %451 = vmatpush1.msra.mxu0 0.0
  %452 = vmatprep.subr.mxu0 0.0
  %453 = vmatpush1.msra.mxu0 0.0
  %454 = vmatprep.subr.mxu0 0.0
  %455 = vmatpush1.msra.mxu0 0.0
  %456 = vmatprep.subr.mxu0 0.0
  %457 = vmatpush1.msra.mxu0 %v210
  %458 = vmatprep.subr.mxu0 0.0
  %459 = vmatpush1.msra.mxu0 %v209
  %460 = vmatprep.subr.mxu0 0.0
  %461 = vmatpush1.msra.mxu0 %v208
  %462 = vmatprep.subr.mxu0 0.0
  %463 = vmatpush1.msra.mxu0 %v207
  %464 = vmatprep.subr.mxu0 0.0
  %465 = vmatpush2.msra.mxu0 0.0
  %466 = vmatprep.subr.mxu0 0.0
  %467 = vmatpush2.msra.mxu0 0.0
  %468 = vmatprep.subr.mxu0 0.0
  %469 = vmatpush2.msra.mxu0 0.0
  %470 = vmatprep.subr.mxu0 0.0
  %471 = vmatpush2.msra.mxu0 0.0
  %472 = vmatprep.subr.mxu0 0.0
  %473 = vmatpush2.msra.mxu0 0.0
  %474 = vmatprep.subr.mxu0 0.0
  %475 = vmatpush2.msra.mxu0 0.0
  %476 = vmatprep.subr.mxu0 0.0
  %477 = vmatpush2.msra.mxu0 0.0
  %478 = vmatprep.subr.mxu0 0.0
  %479 = vmatpush2.msra.mxu0 0.0
  %480 = vmatprep.subr.mxu0 0.0
  %481 = vmatpush2.msra.mxu0 0.0
  %482 = vmatprep.subr.mxu0 0.0
  %483 = vmatpush2.msra.mxu0 0.0
  %484 = vmatprep.subr.mxu0 0.0
  %485 = vmatpush2.msra.mxu0 0.0
  %486 = vmatprep.subr.mxu0 0.0
  %487 = vmatpush2.msra.mxu0 0.0
  %488 = vmatprep.subr.mxu0 0.0
  %489 = vmatpush2.msra.mxu0 0.0
  %490 = vmatprep.subr.mxu0 0.0
  %491 = vmatpush2.msra.mxu0 0.0
  %492 = vmatprep.subr.mxu0 0.0
  %493 = vmatpush2.msra.mxu0 0.0
  %494 = vmatprep.subr.mxu0 0.0
  %495 = vmatpush2.msra.mxu0 0.0
  %496 = vmatprep.mubr.f32.mxu0 0.0
  %497 = vmatmul.mubr.f32.gmra.mxu0 %v430
  %v498 = vpop.f32.mrf.mxu0
  %v499 = vadd.f32 0.0, %v498
  %v500 = vpop.f32.mrf.mxu0
  %501 = vdwg.mxu0
  %v502 = vadd.f32 %v429, %v499
  %v503 = vxor.u32 %v502, 2147483648
  %v504 = vmul.f32 %v503, 1.442695
  %v505 = vpow.pop %v504
  %v506 = vadd.f32 %v505, 1.0
  %v507 = vrcp.pop %v506
  %v508 = vmul.f32 1.0, %v507
  %v509 = vtanh.pop %v502
  %v510 = vmul.f32 %v508, %v312
  %512 = vrot.lane.b32.xlu0 %v509, 64
  %v513 = vpop.permute.xlu0 %512
  %v515 = vmul.f32 %v508, %v513
  %517 = vrot.lane.b32.xlu0 %v515, 32
  %v518 = vpop.permute.xlu0 %517
  %v520 = vadd.f32 %v510, %v518
  %v521 = vtanh.pop %v520
  %523 = vrot.lane.b32.xlu0 %v521, 64
  %v524 = vpop.permute.xlu0 %523
  %v526 = vmul.f32 %v508, %v524
  %528 = vrot.lane.b32.xlu0 %v526, 32
  %v529 = vpop.permute.xlu0 %528
  %532 = vrot.lane.b32.xlu0 %v427, 64
  %v533 = vpop.permute.xlu0 %532
  %v535 = vsel %vm69, %v529, %v533
  %v537 = vsel %vm330, %v535, 0
  %539 = vmatprep.subr.mxu0 0.0
  %540 = vmatpush1.msra.mxu0 0.0
  %541 = vmatprep.subr.mxu0 0.0
  %542 = vmatpush1.msra.mxu0 0.0
  %543 = vmatprep.subr.mxu0 0.0
  %544 = vmatpush1.msra.mxu0 0.0
  %545 = vmatprep.subr.mxu0 0.0
  %546 = vmatpush1.msra.mxu0 0.0
  %547 = vmatprep.subr.mxu0 0.0
  %548 = vmatpush1.msra.mxu0 0.0
  %549 = vmatprep.subr.mxu0 0.0
  %550 = vmatpush1.msra.mxu0 0.0
  %551 = vmatprep.subr.mxu0 0.0
  %552 = vmatpush1.msra.mxu0 0.0
  %553 = vmatprep.subr.mxu0 0.0
  %554 = vmatpush1.msra.mxu0 0.0
  %555 = vmatprep.subr.mxu0 0.0
  %556 = vmatpush1.msra.mxu0 %v218
  %557 = vmatprep.subr.mxu0 0.0
  %558 = vmatpush1.msra.mxu0 %v217
  %559 = vmatprep.subr.mxu0 0.0
  %560 = vmatpush1.msra.mxu0 %v216
  %561 = vmatprep.subr.mxu0 0.0
  %562 = vmatpush1.msra.mxu0 %v215
  %563 = vmatprep.subr.mxu0 0.0
  %564 = vmatpush1.msra.mxu0 %v214
  %565 = vmatprep.subr.mxu0 0.0
  %566 = vmatpush1.msra.mxu0 %v213
  %567 = vmatprep.subr.mxu0 0.0
  %568 = vmatpush1.msra.mxu0 %v212
  %569 = vmatprep.subr.mxu0 0.0
  %570 = vmatpush1.msra.mxu0 %v211
  %571 = vmatprep.subr.mxu0 0.0
  %572 = vmatpush2.msra.mxu0 0.0
  %573 = vmatprep.subr.mxu0 0.0
  %574 = vmatpush2.msra.mxu0 0.0
  %575 = vmatprep.subr.mxu0 0.0
  %576 = vmatpush2.msra.mxu0 0.0
  %577 = vmatprep.subr.mxu0 0.0
  %578 = vmatpush2.msra.mxu0 0.0
  %579 = vmatprep.subr.mxu0 0.0
  %580 = vmatpush2.msra.mxu0 0.0
  %581 = vmatprep.subr.mxu0 0.0
  %582 = vmatpush2.msra.mxu0 0.0
  %583 = vmatprep.subr.mxu0 0.0
  %584 = vmatpush2.msra.mxu0 0.0
  %585 = vmatprep.subr.mxu0 0.0
  %586 = vmatpush2.msra.mxu0 0.0
  %587 = vmatprep.subr.mxu0 0.0
  %588 = vmatpush2.msra.mxu0 0.0
  %589 = vmatprep.subr.mxu0 0.0
  %590 = vmatpush2.msra.mxu0 0.0
  %591 = vmatprep.subr.mxu0 0.0
  %592 = vmatpush2.msra.mxu0 0.0
  %593 = vmatprep.subr.mxu0 0.0
  %594 = vmatpush2.msra.mxu0 0.0
  %595 = vmatprep.subr.mxu0 0.0
  %596 = vmatpush2.msra.mxu0 0.0
  %597 = vmatprep.subr.mxu0 0.0
  %598 = vmatpush2.msra.mxu0 0.0
  %599 = vmatprep.subr.mxu0 0.0
  %600 = vmatpush2.msra.mxu0 0.0
  %601 = vmatprep.subr.mxu0 0.0
  %602 = vmatpush2.msra.mxu0 0.0
  %603 = vmatprep.mubr.f32.mxu0 0.0
  %604 = vmatmul.mubr.f32.gmra.mxu0 %v537
  %v605 = vpop.f32.mrf.mxu0
  %v606 = vadd.f32 %v328, %v605
  %v607 = vpop.f32.mrf.mxu0
  %608 = vdwg.mxu0
  %v609 = vxor.u32 %v606, 2147483648
  %v610 = vmul.f32 %v609, 1.442695
  %v611 = vpow.pop %v610
  %v612 = vadd.f32 %v611, 1.0
  %v613 = vrcp.pop %v612
  %v614 = vmul.f32 1.0, %v613
  %v615 = vtanh.pop %v606
  %v616 = vmul.f32 %v614, %v421
  %618 = vrot.lane.b32.xlu0 %v615, 64
  %v619 = vpop.permute.xlu0 %618
  %v621 = vmul.f32 %v614, %v619
  %623 = vrot.lane.b32.xlu0 %v621, 32
  %v624 = vpop.permute.xlu0 %623
  %v626 = vadd.f32 %v616, %v624
  %v627 = vtanh.pop %v626
  %629 = vrot.lane.b32.xlu0 %v627, 64
  %v630 = vpop.permute.xlu0 %629
  %v632 = vmul.f32 %v614, %v630
  %s633 = scalar_lea.vmem [#allocation2], 16
  %v634 = vld [vmem:[%s633] sm:$0xff]
  %v635 = vsel %vm69, %v529, 0
  %637 = vmatprep.subr.mxu0 0.0
  %638 = vmatpush1.msra.mxu0 0.0
  %639 = vmatprep.subr.mxu0 0.0
  %640 = vmatpush1.msra.mxu0 0.0
  %641 = vmatprep.subr.mxu0 0.0
  %642 = vmatpush1.msra.mxu0 0.0
  %643 = vmatprep.subr.mxu0 0.0
  %644 = vmatpush1.msra.mxu0 0.0
  %645 = vmatprep.subr.mxu0 0.0
  %646 = vmatpush1.msra.mxu0 0.0
  %647 = vmatprep.subr.mxu0 0.0
  %648 = vmatpush1.msra.mxu0 0.0
  %649 = vmatprep.subr.mxu0 0.0
  %650 = vmatpush1.msra.mxu0 0.0
  %651 = vmatprep.subr.mxu0 0.0
  %652 = vmatpush1.msra.mxu0 0.0
  %653 = vmatprep.subr.mxu0 0.0
  %654 = vmatpush1.msra.mxu0 0.0
  %655 = vmatprep.subr.mxu0 0.0
  %656 = vmatpush1.msra.mxu0 0.0
  %657 = vmatprep.subr.mxu0 0.0
  %658 = vmatpush1.msra.mxu0 0.0
  %659 = vmatprep.subr.mxu0 0.0
  %660 = vmatpush1.msra.mxu0 0.0
  %661 = vmatprep.subr.mxu0 0.0
  %662 = vmatpush1.msra.mxu0 %v210
  %663 = vmatprep.subr.mxu0 0.0
  %664 = vmatpush1.msra.mxu0 %v209
  %665 = vmatprep.subr.mxu0 0.0
  %666 = vmatpush1.msra.mxu0 %v208
  %667 = vmatprep.subr.mxu0 0.0
  %668 = vmatpush1.msra.mxu0 %v207
  %669 = vmatprep.subr.mxu0 0.0
  %670 = vmatpush2.msra.mxu0 0.0
  %671 = vmatprep.subr.mxu0 0.0
  %672 = vmatpush2.msra.mxu0 0.0
  %673 = vmatprep.subr.mxu0 0.0
  %674 = vmatpush2.msra.mxu0 0.0
  %675 = vmatprep.subr.mxu0 0.0
  %676 = vmatpush2.msra.mxu0 0.0
  %677 = vmatprep.subr.mxu0 0.0
  %678 = vmatpush2.msra.mxu0 0.0
  %679 = vmatprep.subr.mxu0 0.0
  %680 = vmatpush2.msra.mxu0 0.0
  %681 = vmatprep.subr.mxu0 0.0
  %682 = vmatpush2.msra.mxu0 0.0
  %683 = vmatprep.subr.mxu0 0.0
  %684 = vmatpush2.msra.mxu0 0.0
  %685 = vmatprep.subr.mxu0 0.0
  %686 = vmatpush2.msra.mxu0 0.0
  %687 = vmatprep.subr.mxu0 0.0
  %688 = vmatpush2.msra.mxu0 0.0
  %689 = vmatprep.subr.mxu0 0.0
  %690 = vmatpush2.msra.mxu0 0.0
  %691 = vmatprep.subr.mxu0 0.0
  %692 = vmatpush2.msra.mxu0 0.0
  %693 = vmatprep.subr.mxu0 0.0
  %694 = vmatpush2.msra.mxu0 0.0
  %695 = vmatprep.subr.mxu0 0.0
  %696 = vmatpush2.msra.mxu0 0.0
  %697 = vmatprep.subr.mxu0 0.0
  %698 = vmatpush2.msra.mxu0 0.0
  %699 = vmatprep.subr.mxu0 0.0
  %700 = vmatpush2.msra.mxu0 0.0
  %701 = vmatprep.mubr.f32.mxu0 0.0
  %702 = vmatmul.mubr.f32.gmra.mxu0 %v635
  %v703 = vpop.f32.mrf.mxu0
  %v704 = vadd.f32 0.0, %v703
  %v705 = vpop.f32.mrf.mxu0
  %706 = vdwg.mxu0
  %v707 = vadd.f32 %v634, %v704
  %v708 = vxor.u32 %v707, 2147483648
  %v709 = vmul.f32 %v708, 1.442695
  %v710 = vpow.pop %v709
  %v711 = vadd.f32 %v710, 1.0
  %v712 = vrcp.pop %v711
  %v713 = vmul.f32 1.0, %v712
  %v714 = vtanh.pop %v707
  %v715 = vmul.f32 %v713, %v520
  %717 = vrot.lane.b32.xlu0 %v714, 64
  %v718 = vpop.permute.xlu0 %717
  %v720 = vmul.f32 %v713, %v718
  %722 = vrot.lane.b32.xlu0 %v720, 32
  %v723 = vpop.permute.xlu0 %722
  %v725 = vadd.f32 %v715, %v723
  %v726 = vtanh.pop %v725
  %728 = vrot.lane.b32.xlu0 %v726, 64
  %v729 = vpop.permute.xlu0 %728
  %v731 = vmul.f32 %v713, %v729
  %733 = vrot.lane.b32.xlu0 %v731, 32
  %v734 = vpop.permute.xlu0 %733
  %737 = vrot.lane.b32.xlu0 %v632, 64
  %v738 = vpop.permute.xlu0 %737
  %v740 = vsel %vm69, %v734, %v738
  %v742 = vsel %vm330, %v740, 0
  %744 = vmatprep.subr.mxu0 0.0
  %745 = vmatpush1.msra.mxu0 0.0
  %746 = vmatprep.subr.mxu0 0.0
  %747 = vmatpush1.msra.mxu0 0.0
  %748 = vmatprep.subr.mxu0 0.0
  %749 = vmatpush1.msra.mxu0 0.0
  %750 = vmatprep.subr.mxu0 0.0
  %751 = vmatpush1.msra.mxu0 0.0
  %752 = vmatprep.subr.mxu0 0.0
  %753 = vmatpush1.msra.mxu0 0.0
  %754 = vmatprep.subr.mxu0 0.0
  %755 = vmatpush1.msra.mxu0 0.0
  %756 = vmatprep.subr.mxu0 0.0
  %757 = vmatpush1.msra.mxu0 0.0
  %758 = vmatprep.subr.mxu0 0.0
  %759 = vmatpush1.msra.mxu0 0.0
  %760 = vmatprep.subr.mxu0 0.0
  %761 = vmatpush1.msra.mxu0 %v218
  %762 = vmatprep.subr.mxu0 0.0
  %763 = vmatpush1.msra.mxu0 %v217
  %764 = vmatprep.subr.mxu0 0.0
  %765 = vmatpush1.msra.mxu0 %v216
  %766 = vmatprep.subr.mxu0 0.0
  %767 = vmatpush1.msra.mxu0 %v215
  %768 = vmatprep.subr.mxu0 0.0
  %769 = vmatpush1.msra.mxu0 %v214
  %770 = vmatprep.subr.mxu0 0.0
  %771 = vmatpush1.msra.mxu0 %v213
  %772 = vmatprep.subr.mxu0 0.0
  %773 = vmatpush1.msra.mxu0 %v212
  %774 = vmatprep.subr.mxu0 0.0
  %775 = vmatpush1.msra.mxu0 %v211
  %776 = vmatprep.subr.mxu0 0.0
  %777 = vmatpush2.msra.mxu0 0.0
  %778 = vmatprep.subr.mxu0 0.0
  %779 = vmatpush2.msra.mxu0 0.0
  %780 = vmatprep.subr.mxu0 0.0
  %781 = vmatpush2.msra.mxu0 0.0
  %782 = vmatprep.subr.mxu0 0.0
  %783 = vmatpush2.msra.mxu0 0.0
  %784 = vmatprep.subr.mxu0 0.0
  %785 = vmatpush2.msra.mxu0 0.0
  %786 = vmatprep.subr.mxu0 0.0
  %787 = vmatpush2.msra.mxu0 0.0
  %788 = vmatprep.subr.mxu0 0.0
  %789 = vmatpush2.msra.mxu0 0.0
  %790 = vmatprep.subr.mxu0 0.0
  %791 = vmatpush2.msra.mxu0 0.0
  %792 = vmatprep.subr.mxu0 0.0
  %793 = vmatpush2.msra.mxu0 0.0
  %794 = vmatprep.subr.mxu0 0.0
  %795 = vmatpush2.msra.mxu0 0.0
  %796 = vmatprep.subr.mxu0 0.0
  %797 = vmatpush2.msra.mxu0 0.0
  %798 = vmatprep.subr.mxu0 0.0
  %799 = vmatpush2.msra.mxu0 0.0
  %800 = vmatprep.subr.mxu0 0.0
  %801 = vmatpush2.msra.mxu0 0.0
  %802 = vmatprep.subr.mxu0 0.0
  %803 = vmatpush2.msra.mxu0 0.0
  %804 = vmatprep.subr.mxu0 0.0
  %805 = vmatpush2.msra.mxu0 0.0
  %806 = vmatprep.subr.mxu0 0.0
  %807 = vmatpush2.msra.mxu0 0.0
  %808 = vmatprep.mubr.f32.mxu0 0.0
  %809 = vmatmul.mubr.f32.gmra.mxu0 %v742
  %v810 = vpop.f32.mrf.mxu0
  %v811 = vadd.f32 %v328, %v810
  %v812 = vpop.f32.mrf.mxu0
  %813 = vdwg.mxu0
  %v814 = vxor.u32 %v811, 2147483648
  %v815 = vmul.f32 %v814, 1.442695
  %v816 = vpow.pop %v815
  %v817 = vadd.f32 %v816, 1.0
  %v818 = vrcp.pop %v817
  %v819 = vmul.f32 1.0, %v818
  %v820 = vtanh.pop %v811
  %v821 = vmul.f32 %v819, %v626
  %823 = vrot.lane.b32.xlu0 %v820, 64
  %v824 = vpop.permute.xlu0 %823
  %v826 = vmul.f32 %v819, %v824
  %828 = vrot.lane.b32.xlu0 %v826, 32
  %v829 = vpop.permute.xlu0 %828
  %v831 = vadd.f32 %v821, %v829
  %v832 = vtanh.pop %v831
  %834 = vrot.lane.b32.xlu0 %v832, 64
  %v835 = vpop.permute.xlu0 %834
  %v837 = vmul.f32 %v819, %v835
  %s838 = scalar_lea.vmem [#allocation2], 24
  %v839 = vld [vmem:[%s838] sm:$0xff]
  %v840 = vsel %vm69, %v734, 0
  %842 = vmatprep.subr.mxu0 0.0
  %843 = vmatpush1.msra.mxu0 0.0
  %844 = vmatprep.subr.mxu0 0.0
  %845 = vmatpush1.msra.mxu0 0.0
  %846 = vmatprep.subr.mxu0 0.0
  %847 = vmatpush1.msra.mxu0 0.0
  %848 = vmatprep.subr.mxu0 0.0
  %849 = vmatpush1.msra.mxu0 0.0
  %850 = vmatprep.subr.mxu0 0.0
  %851 = vmatpush1.msra.mxu0 0.0
  %852 = vmatprep.subr.mxu0 0.0
  %853 = vmatpush1.msra.mxu0 0.0
  %854 = vmatprep.subr.mxu0 0.0
  %855 = vmatpush1.msra.mxu0 0.0
  %856 = vmatprep.subr.mxu0 0.0
  %857 = vmatpush1.msra.mxu0 0.0
  %858 = vmatprep.subr.mxu0 0.0
  %859 = vmatpush1.msra.mxu0 0.0
  %860 = vmatprep.subr.mxu0 0.0
  %861 = vmatpush1.msra.mxu0 0.0
  %862 = vmatprep.subr.mxu0 0.0
  %863 = vmatpush1.msra.mxu0 0.0
  %864 = vmatprep.subr.mxu0 0.0
  %865 = vmatpush1.msra.mxu0 0.0
  %866 = vmatprep.subr.mxu0 0.0
  %867 = vmatpush1.msra.mxu0 %v210
  %868 = vmatprep.subr.mxu0 0.0
  %869 = vmatpush1.msra.mxu0 %v209
  %870 = vmatprep.subr.mxu0 0.0
  %871 = vmatpush1.msra.mxu0 %v208
  %872 = vmatprep.subr.mxu0 0.0
  %873 = vmatpush1.msra.mxu0 %v207
  %874 = vmatprep.subr.mxu0 0.0
  %875 = vmatpush2.msra.mxu0 0.0
  %876 = vmatprep.subr.mxu0 0.0
  %877 = vmatpush2.msra.mxu0 0.0
  %878 = vmatprep.subr.mxu0 0.0
  %879 = vmatpush2.msra.mxu0 0.0
  %880 = vmatprep.subr.mxu0 0.0
  %881 = vmatpush2.msra.mxu0 0.0
  %882 = vmatprep.subr.mxu0 0.0
  %883 = vmatpush2.msra.mxu0 0.0
  %884 = vmatprep.subr.mxu0 0.0
  %885 = vmatpush2.msra.mxu0 0.0
  %886 = vmatprep.subr.mxu0 0.0
  %887 = vmatpush2.msra.mxu0 0.0
  %888 = vmatprep.subr.mxu0 0.0
  %889 = vmatpush2.msra.mxu0 0.0
  %890 = vmatprep.subr.mxu0 0.0
  %891 = vmatpush2.msra.mxu0 0.0
  %892 = vmatprep.subr.mxu0 0.0
  %893 = vmatpush2.msra.mxu0 0.0
  %894 = vmatprep.subr.mxu0 0.0
  %895 = vmatpush2.msra.mxu0 0.0
  %896 = vmatprep.subr.mxu0 0.0
  %897 = vmatpush2.msra.mxu0 0.0
  %898 = vmatprep.subr.mxu0 0.0
  %899 = vmatpush2.msra.mxu0 0.0
  %900 = vmatprep.subr.mxu0 0.0
  %901 = vmatpush2.msra.mxu0 0.0
  %902 = vmatprep.subr.mxu0 0.0
  %903 = vmatpush2.msra.mxu0 0.0
  %904 = vmatprep.subr.mxu0 0.0
  %905 = vmatpush2.msra.mxu0 0.0
  %906 = vmatprep.mubr.f32.mxu0 0.0
  %907 = vmatmul.mubr.f32.gmra.mxu0 %v840
  %v908 = vpop.f32.mrf.mxu0
  %v909 = vadd.f32 0.0, %v908
  %v910 = vpop.f32.mrf.mxu0
  %911 = vdwg.mxu0
  %v912 = vadd.f32 %v839, %v909
  %v913 = vxor.u32 %v912, 2147483648
  %v914 = vmul.f32 %v913, 1.442695
  %v915 = vpow.pop %v914
  %v916 = vadd.f32 %v915, 1.0
  %v917 = vrcp.pop %v916
  %v918 = vmul.f32 1.0, %v917
  %v919 = vtanh.pop %v912
  %v920 = vmul.f32 %v918, %v725
  %922 = vrot.lane.b32.xlu0 %v919, 64
  %v923 = vpop.permute.xlu0 %922
  %v925 = vmul.f32 %v918, %v923
  %927 = vrot.lane.b32.xlu0 %v925, 32
  %v928 = vpop.permute.xlu0 %927
  %v930 = vadd.f32 %v920, %v928
  %v931 = vtanh.pop %v930
  %933 = vrot.lane.b32.xlu0 %v931, 64
  %v934 = vpop.permute.xlu0 %933
  %v936 = vmul.f32 %v918, %v934
  %938 = vrot.lane.b32.xlu0 %v936, 32
  %v939 = vpop.permute.xlu0 %938
  %942 = vrot.lane.b32.xlu0 %v837, 64
  %v943 = vpop.permute.xlu0 %942
  %v945 = vsel %vm69, %v939, %v943
  %v947 = vsel %vm330, %v945, 0
  %949 = vmatprep.subr.mxu0 0.0
  %950 = vmatpush1.msra.mxu0 0.0
  %951 = vmatprep.subr.mxu0 0.0
  %952 = vmatpush1.msra.mxu0 0.0
  %953 = vmatprep.subr.mxu0 0.0
  %954 = vmatpush1.msra.mxu0 0.0
  %955 = vmatprep.subr.mxu0 0.0
  %956 = vmatpush1.msra.mxu0 0.0
  %957 = vmatprep.subr.mxu0 0.0
  %958 = vmatpush1.msra.mxu0 0.0
  %959 = vmatprep.subr.mxu0 0.0
  %960 = vmatpush1.msra.mxu0 0.0
  %961 = vmatprep.subr.mxu0 0.0
  %962 = vmatpush1.msra.mxu0 0.0
  %963 = vmatprep.subr.mxu0 0.0
  %964 = vmatpush1.msra.mxu0 0.0
  %965 = vmatprep.subr.mxu0 0.0
  %966 = vmatpush1.msra.mxu0 %v218
  %967 = vmatprep.subr.mxu0 0.0
  %968 = vmatpush1.msra.mxu0 %v217
  %969 = vmatprep.subr.mxu0 0.0
  %970 = vmatpush1.msra.mxu0 %v216
  %971 = vmatprep.subr.mxu0 0.0
  %972 = vmatpush1.msra.mxu0 %v215
  %973 = vmatprep.subr.mxu0 0.0
  %974 = vmatpush1.msra.mxu0 %v214
  %975 = vmatprep.subr.mxu0 0.0
  %976 = vmatpush1.msra.mxu0 %v213
  %977 = vmatprep.subr.mxu0 0.0
  %978 = vmatpush1.msra.mxu0 %v212
  %979 = vmatprep.subr.mxu0 0.0
  %980 = vmatpush1.msra.mxu0 %v211
  %981 = vmatprep.subr.mxu0 0.0
  %982 = vmatpush2.msra.mxu0 0.0
  %983 = vmatprep.subr.mxu0 0.0
  %984 = vmatpush2.msra.mxu0 0.0
  %985 = vmatprep.subr.mxu0 0.0
  %986 = vmatpush2.msra.mxu0 0.0
  %987 = vmatprep.subr.mxu0 0.0
  %988 = vmatpush2.msra.mxu0 0.0
  %989 = vmatprep.subr.mxu0 0.0
  %990 = vmatpush2.msra.mxu0 0.0
  %991 = vmatprep.subr.mxu0 0.0
  %992 = vmatpush2.msra.mxu0 0.0
  %993 = vmatprep.subr.mxu0 0.0
  %994 = vmatpush2.msra.mxu0 0.0
  %995 = vmatprep.subr.mxu0 0.0
  %996 = vmatpush2.msra.mxu0 0.0
  %997 = vmatprep.subr.mxu0 0.0
  %998 = vmatpush2.msra.mxu0 0.0
  %999 = vmatprep.subr.mxu0 0.0
  %1000 = vmatpush2.msra.mxu0 0.0
  %1001 = vmatprep.subr.mxu0 0.0
  %1002 = vmatpush2.msra.mxu0 0.0
  %1003 = vmatprep.subr.mxu0 0.0
  %1004 = vmatpush2.msra.mxu0 0.0
  %1005 = vmatprep.subr.mxu0 0.0
  %1006 = vmatpush2.msra.mxu0 0.0
  %1007 = vmatprep.subr.mxu0 0.0
  %1008 = vmatpush2.msra.mxu0 0.0
  %1009 = vmatprep.subr.mxu0 0.0
  %1010 = vmatpush2.msra.mxu0 0.0
  %1011 = vmatprep.subr.mxu0 0.0
  %1012 = vmatpush2.msra.mxu0 0.0
  %1013 = vmatprep.mubr.f32.mxu0 0.0
  %1014 = vmatmul.mubr.f32.gmra.mxu0 %v947
  %v1015 = vpop.f32.mrf.mxu0
  %v1016 = vadd.f32 %v328, %v1015
  %v1017 = vpop.f32.mrf.mxu0
  %1018 = vdwg.mxu0
  %v1019 = vxor.u32 %v1016, 2147483648
  %v1020 = vmul.f32 %v1019, 1.442695
  %v1021 = vpow.pop %v1020
  %v1022 = vadd.f32 %v1021, 1.0
  %v1023 = vrcp.pop %v1022
  %v1024 = vmul.f32 1.0, %v1023
  %v1025 = vtanh.pop %v1016
  %v1026 = vmul.f32 %v1024, %v831
  %1028 = vrot.lane.b32.xlu0 %v1025, 64
  %v1029 = vpop.permute.xlu0 %1028
  %v1031 = vmul.f32 %v1024, %v1029
  %1033 = vrot.lane.b32.xlu0 %v1031, 32
  %v1034 = vpop.permute.xlu0 %1033
  %v1036 = vadd.f32 %v1026, %v1034
  %v1037 = vtanh.pop %v1036
  %1039 = vrot.lane.b32.xlu0 %v1037, 64
  %v1040 = vpop.permute.xlu0 %1039
  %v1042 = vmul.f32 %v1024, %v1040
  %s1043 = scalar_lea.vmem [#allocation2], 32
  %v1044 = vld [vmem:[%s1043] sm:$0xff]
  %v1045 = vsel %vm69, %v939, 0
  %1047 = vmatprep.subr.mxu0 0.0
  %1048 = vmatpush1.msra.mxu0 0.0
  %1049 = vmatprep.subr.mxu0 0.0
  %1050 = vmatpush1.msra.mxu0 0.0
  %1051 = vmatprep.subr.mxu0 0.0
  %1052 = vmatpush1.msra.mxu0 0.0
  %1053 = vmatprep.subr.mxu0 0.0
  %1054 = vmatpush1.msra.mxu0 0.0
  %1055 = vmatprep.subr.mxu0 0.0
  %1056 = vmatpush1.msra.mxu0 0.0
  %1057 = vmatprep.subr.mxu0 0.0
  %1058 = vmatpush1.msra.mxu0 0.0
  %1059 = vmatprep.subr.mxu0 0.0
  %1060 = vmatpush1.msra.mxu0 0.0
  %1061 = vmatprep.subr.mxu0 0.0
  %1062 = vmatpush1.msra.mxu0 0.0
  %1063 = vmatprep.subr.mxu0 0.0
  %1064 = vmatpush1.msra.mxu0 0.0
  %1065 = vmatprep.subr.mxu0 0.0
  %1066 = vmatpush1.msra.mxu0 0.0
  %1067 = vmatprep.subr.mxu0 0.0
  %1068 = vmatpush1.msra.mxu0 0.0
  %1069 = vmatprep.subr.mxu0 0.0
  %1070 = vmatpush1.msra.mxu0 0.0
  %1071 = vmatprep.subr.mxu0 0.0
  %1072 = vmatpush1.msra.mxu0 %v210
  %1073 = vmatprep.subr.mxu0 0.0
  %1074 = vmatpush1.msra.mxu0 %v209
  %1075 = vmatprep.subr.mxu0 0.0
  %1076 = vmatpush1.msra.mxu0 %v208
  %1077 = vmatprep.subr.mxu0 0.0
  %1078 = vmatpush1.msra.mxu0 %v207
  %1079 = vmatprep.subr.mxu0 0.0
  %1080 = vmatpush2.msra.mxu0 0.0
  %1081 = vmatprep.subr.mxu0 0.0
  %1082 = vmatpush2.msra.mxu0 0.0
  %1083 = vmatprep.subr.mxu0 0.0
  %1084 = vmatpush2.msra.mxu0 0.0
  %1085 = vmatprep.subr.mxu0 0.0
  %1086 = vmatpush2.msra.mxu0 0.0
  %1087 = vmatprep.subr.mxu0 0.0
  %1088 = vmatpush2.msra.mxu0 0.0
  %1089 = vmatprep.subr.mxu0 0.0
  %1090 = vmatpush2.msra.mxu0 0.0
  %1091 = vmatprep.subr.mxu0 0.0
  %1092 = vmatpush2.msra.mxu0 0.0
  %1093 = vmatprep.subr.mxu0 0.0
  %1094 = vmatpush2.msra.mxu0 0.0
  %1095 = vmatprep.subr.mxu0 0.0
  %1096 = vmatpush2.msra.mxu0 0.0
  %1097 = vmatprep.subr.mxu0 0.0
  %1098 = vmatpush2.msra.mxu0 0.0
  %1099 = vmatprep.subr.mxu0 0.0
  %1100 = vmatpush2.msra.mxu0 0.0
  %1101 = vmatprep.subr.mxu0 0.0
  %1102 = vmatpush2.msra.mxu0 0.0
  %1103 = vmatprep.subr.mxu0 0.0
  %1104 = vmatpush2.msra.mxu0 0.0
  %1105 = vmatprep.subr.mxu0 0.0
  %1106 = vmatpush2.msra.mxu0 0.0
  %1107 = vmatprep.subr.mxu0 0.0
  %1108 = vmatpush2.msra.mxu0 0.0
  %1109 = vmatprep.subr.mxu0 0.0
  %1110 = vmatpush2.msra.mxu0 0.0
  %1111 = vmatprep.mubr.f32.mxu0 0.0
  %1112 = vmatmul.mubr.f32.gmra.mxu0 %v1045
  %v1113 = vpop.f32.mrf.mxu0
  %v1114 = vadd.f32 0.0, %v1113
  %v1115 = vpop.f32.mrf.mxu0
  %1116 = vdwg.mxu0
  %v1117 = vadd.f32 %v1044, %v1114
  %v1118 = vxor.u32 %v1117, 2147483648
  %v1119 = vmul.f32 %v1118, 1.442695
  %v1120 = vpow.pop %v1119
  %v1121 = vadd.f32 %v1120, 1.0
  %v1122 = vrcp.pop %v1121
  %v1123 = vmul.f32 1.0, %v1122
  %v1124 = vtanh.pop %v1117
  %v1125 = vmul.f32 %v1123, %v930
  %1127 = vrot.lane.b32.xlu0 %v1124, 64
  %v1128 = vpop.permute.xlu0 %1127
  %v1130 = vmul.f32 %v1123, %v1128
  %1132 = vrot.lane.b32.xlu0 %v1130, 32
  %v1133 = vpop.permute.xlu0 %1132
  %v1135 = vadd.f32 %v1125, %v1133
  %v1136 = vtanh.pop %v1135
  %1138 = vrot.lane.b32.xlu0 %v1136, 64
  %v1139 = vpop.permute.xlu0 %1138
  %v1141 = vmul.f32 %v1123, %v1139
  %1143 = vrot.lane.b32.xlu0 %v1141, 32
  %v1144 = vpop.permute.xlu0 %1143
  %1147 = vrot.lane.b32.xlu0 %v1042, 64
  %v1148 = vpop.permute.xlu0 %1147
  %v1150 = vsel %vm69, %v1144, %v1148
  %v1152 = vsel %vm330, %v1150, 0
  %1154 = vmatprep.subr.mxu0 0.0
  %1155 = vmatpush1.msra.mxu0 0.0
  %1156 = vmatprep.subr.mxu0 0.0
  %1157 = vmatpush1.msra.mxu0 0.0
  %1158 = vmatprep.subr.mxu0 0.0
  %1159 = vmatpush1.msra.mxu0 0.0
  %1160 = vmatprep.subr.mxu0 0.0
  %1161 = vmatpush1.msra.mxu0 0.0
  %1162 = vmatprep.subr.mxu0 0.0
  %1163 = vmatpush1.msra.mxu0 0.0
  %1164 = vmatprep.subr.mxu0 0.0
  %1165 = vmatpush1.msra.mxu0 0.0
  %1166 = vmatprep.subr.mxu0 0.0
  %1167 = vmatpush1.msra.mxu0 0.0
  %1168 = vmatprep.subr.mxu0 0.0
  %1169 = vmatpush1.msra.mxu0 0.0
  %1170 = vmatprep.subr.mxu0 0.0
  %1171 = vmatpush1.msra.mxu0 %v218
  %1172 = vmatprep.subr.mxu0 0.0
  %1173 = vmatpush1.msra.mxu0 %v217
  %1174 = vmatprep.subr.mxu0 0.0
  %1175 = vmatpush1.msra.mxu0 %v216
  %1176 = vmatprep.subr.mxu0 0.0
  %1177 = vmatpush1.msra.mxu0 %v215
  %1178 = vmatprep.subr.mxu0 0.0
  %1179 = vmatpush1.msra.mxu0 %v214
  %1180 = vmatprep.subr.mxu0 0.0
  %1181 = vmatpush1.msra.mxu0 %v213
  %1182 = vmatprep.subr.mxu0 0.0
  %1183 = vmatpush1.msra.mxu0 %v212
  %1184 = vmatprep.subr.mxu0 0.0
  %1185 = vmatpush1.msra.mxu0 %v211
  %1186 = vmatprep.subr.mxu0 0.0
  %1187 = vmatpush2.msra.mxu0 0.0
  %1188 = vmatprep.subr.mxu0 0.0
  %1189 = vmatpush2.msra.mxu0 0.0
  %1190 = vmatprep.subr.mxu0 0.0
  %1191 = vmatpush2.msra.mxu0 0.0
  %1192 = vmatprep.subr.mxu0 0.0
  %1193 = vmatpush2.msra.mxu0 0.0
  %1194 = vmatprep.subr.mxu0 0.0
  %1195 = vmatpush2.msra.mxu0 0.0
  %1196 = vmatprep.subr.mxu0 0.0
  %1197 = vmatpush2.msra.mxu0 0.0
  %1198 = vmatprep.subr.mxu0 0.0
  %1199 = vmatpush2.msra.mxu0 0.0
  %1200 = vmatprep.subr.mxu0 0.0
  %1201 = vmatpush2.msra.mxu0 0.0
  %1202 = vmatprep.subr.mxu0 0.0
  %1203 = vmatpush2.msra.mxu0 0.0
  %1204 = vmatprep.subr.mxu0 0.0
  %1205 = vmatpush2.msra.mxu0 0.0
  %1206 = vmatprep.subr.mxu0 0.0
  %1207 = vmatpush2.msra.mxu0 0.0
  %1208 = vmatprep.subr.mxu0 0.0
  %1209 = vmatpush2.msra.mxu0 0.0
  %1210 = vmatprep.subr.mxu0 0.0
  %1211 = vmatpush2.msra.mxu0 0.0
  %1212 = vmatprep.subr.mxu0 0.0
  %1213 = vmatpush2.msra.mxu0 0.0
  %1214 = vmatprep.subr.mxu0 0.0
  %1215 = vmatpush2.msra.mxu0 0.0
  %1216 = vmatprep.subr.mxu0 0.0
  %1217 = vmatpush2.msra.mxu0 0.0
  %1218 = vmatprep.mubr.f32.mxu0 0.0
  %1219 = vmatmul.mubr.f32.gmra.mxu0 %v1152
  %v1220 = vpop.f32.mrf.mxu0
  %v1221 = vadd.f32 %v328, %v1220
  %v1222 = vpop.f32.mrf.mxu0
  %1223 = vdwg.mxu0
  %v1224 = vxor.u32 %v1221, 2147483648
  %v1225 = vmul.f32 %v1224, 1.442695
  %v1226 = vpow.pop %v1225
  %v1227 = vadd.f32 %v1226, 1.0
  %v1228 = vrcp.pop %v1227
  %v1229 = vmul.f32 1.0, %v1228
  %v1230 = vtanh.pop %v1221
  %v1231 = vmul.f32 %v1229, %v1036
  %1233 = vrot.lane.b32.xlu0 %v1230, 64
  %v1234 = vpop.permute.xlu0 %1233
  %v1236 = vmul.f32 %v1229, %v1234
  %1238 = vrot.lane.b32.xlu0 %v1236, 32
  %v1239 = vpop.permute.xlu0 %1238
  %v1241 = vadd.f32 %v1231, %v1239
  %v1242 = vtanh.pop %v1241
  %1244 = vrot.lane.b32.xlu0 %v1242, 64
  %v1245 = vpop.permute.xlu0 %1244
  %v1247 = vmul.f32 %v1229, %v1245
  %s1248 = scalar_lea.vmem [#allocation2], 40
  %v1249 = vld [vmem:[%s1248] sm:$0xff]
  %v1250 = vsel %vm69, %v1144, 0
  %1252 = vmatprep.subr.mxu0 0.0
  %1253 = vmatpush1.msra.mxu0 0.0
  %1254 = vmatprep.subr.mxu0 0.0
  %1255 = vmatpush1.msra.mxu0 0.0
  %1256 = vmatprep.subr.mxu0 0.0
  %1257 = vmatpush1.msra.mxu0 0.0
  %1258 = vmatprep.subr.mxu0 0.0
  %1259 = vmatpush1.msra.mxu0 0.0
  %1260 = vmatprep.subr.mxu0 0.0
  %1261 = vmatpush1.msra.mxu0 0.0
  %1262 = vmatprep.subr.mxu0 0.0
  %1263 = vmatpush1.msra.mxu0 0.0
  %1264 = vmatprep.subr.mxu0 0.0
  %1265 = vmatpush1.msra.mxu0 0.0
  %1266 = vmatprep.subr.mxu0 0.0
  %1267 = vmatpush1.msra.mxu0 0.0
  %1268 = vmatprep.subr.mxu0 0.0
  %1269 = vmatpush1.msra.mxu0 0.0
  %1270 = vmatprep.subr.mxu0 0.0
  %1271 = vmatpush1.msra.mxu0 0.0
  %1272 = vmatprep.subr.mxu0 0.0
  %1273 = vmatpush1.msra.mxu0 0.0
  %1274 = vmatprep.subr.mxu0 0.0
  %1275 = vmatpush1.msra.mxu0 0.0
  %1276 = vmatprep.subr.mxu0 0.0
  %1277 = vmatpush1.msra.mxu0 %v210
  %1278 = vmatprep.subr.mxu0 0.0
  %1279 = vmatpush1.msra.mxu0 %v209
  %1280 = vmatprep.subr.mxu0 0.0
  %1281 = vmatpush1.msra.mxu0 %v208
  %1282 = vmatprep.subr.mxu0 0.0
  %1283 = vmatpush1.msra.mxu0 %v207
  %1284 = vmatprep.subr.mxu0 0.0
  %1285 = vmatpush2.msra.mxu0 0.0
  %1286 = vmatprep.subr.mxu0 0.0
  %1287 = vmatpush2.msra.mxu0 0.0
  %1288 = vmatprep.subr.mxu0 0.0
  %1289 = vmatpush2.msra.mxu0 0.0
  %1290 = vmatprep.subr.mxu0 0.0
  %1291 = vmatpush2.msra.mxu0 0.0
  %1292 = vmatprep.subr.mxu0 0.0
  %1293 = vmatpush2.msra.mxu0 0.0
  %1294 = vmatprep.subr.mxu0 0.0
  %1295 = vmatpush2.msra.mxu0 0.0
  %1296 = vmatprep.subr.mxu0 0.0
  %1297 = vmatpush2.msra.mxu0 0.0
  %1298 = vmatprep.subr.mxu0 0.0
  %1299 = vmatpush2.msra.mxu0 0.0
  %1300 = vmatprep.subr.mxu0 0.0
  %1301 = vmatpush2.msra.mxu0 0.0
  %1302 = vmatprep.subr.mxu0 0.0
  %1303 = vmatpush2.msra.mxu0 0.0
  %1304 = vmatprep.subr.mxu0 0.0
  %1305 = vmatpush2.msra.mxu0 0.0
  %1306 = vmatprep.subr.mxu0 0.0
  %1307 = vmatpush2.msra.mxu0 0.0
  %1308 = vmatprep.subr.mxu0 0.0
  %1309 = vmatpush2.msra.mxu0 0.0
  %1310 = vmatprep.subr.mxu0 0.0
  %1311 = vmatpush2.msra.mxu0 0.0
  %1312 = vmatprep.subr.mxu0 0.0
  %1313 = vmatpush2.msra.mxu0 0.0
  %1314 = vmatprep.subr.mxu0 0.0
  %1315 = vmatpush2.msra.mxu0 0.0
  %1316 = vmatprep.mubr.f32.mxu0 0.0
  %1317 = vmatmul.mubr.f32.gmra.mxu0 %v1250
  %v1318 = vpop.f32.mrf.mxu0
  %v1319 = vadd.f32 0.0, %v1318
  %v1320 = vpop.f32.mrf.mxu0
  %1321 = vdwg.mxu0
  %v1322 = vadd.f32 %v1249, %v1319
  %v1323 = vxor.u32 %v1322, 2147483648
  %v1324 = vmul.f32 %v1323, 1.442695
  %v1325 = vpow.pop %v1324
  %v1326 = vadd.f32 %v1325, 1.0
  %v1327 = vrcp.pop %v1326
  %v1328 = vmul.f32 1.0, %v1327
  %v1329 = vtanh.pop %v1322
  %v1330 = vmul.f32 %v1328, %v1135
  %1332 = vrot.lane.b32.xlu0 %v1329, 64
  %v1333 = vpop.permute.xlu0 %1332
  %v1335 = vmul.f32 %v1328, %v1333
  %1337 = vrot.lane.b32.xlu0 %v1335, 32
  %v1338 = vpop.permute.xlu0 %1337
  %v1340 = vadd.f32 %v1330, %v1338
  %v1341 = vtanh.pop %v1340
  %1343 = vrot.lane.b32.xlu0 %v1341, 64
  %v1344 = vpop.permute.xlu0 %1343
  %v1346 = vmul.f32 %v1328, %v1344
  %1348 = vrot.lane.b32.xlu0 %v1346, 32
  %v1349 = vpop.permute.xlu0 %1348
  %1352 = vrot.lane.b32.xlu0 %v1247, 64
  %v1353 = vpop.permute.xlu0 %1352
  %v1355 = vsel %vm69, %v1349, %v1353
  %v1357 = vsel %vm330, %v1355, 0
  %1359 = vmatprep.subr.mxu0 0.0
  %1360 = vmatpush1.msra.mxu0 0.0
  %1361 = vmatprep.subr.mxu0 0.0
  %1362 = vmatpush1.msra.mxu0 0.0
  %1363 = vmatprep.subr.mxu0 0.0
  %1364 = vmatpush1.msra.mxu0 0.0
  %1365 = vmatprep.subr.mxu0 0.0
  %1366 = vmatpush1.msra.mxu0 0.0
  %1367 = vmatprep.subr.mxu0 0.0
  %1368 = vmatpush1.msra.mxu0 0.0
  %1369 = vmatprep.subr.mxu0 0.0
  %1370 = vmatpush1.msra.mxu0 0.0
  %1371 = vmatprep.subr.mxu0 0.0
  %1372 = vmatpush1.msra.mxu0 0.0
  %1373 = vmatprep.subr.mxu0 0.0
  %1374 = vmatpush1.msra.mxu0 0.0
  %1375 = vmatprep.subr.mxu0 0.0
  %1376 = vmatpush1.msra.mxu0 %v218
  %1377 = vmatprep.subr.mxu0 0.0
  %1378 = vmatpush1.msra.mxu0 %v217
  %1379 = vmatprep.subr.mxu0 0.0
  %1380 = vmatpush1.msra.mxu0 %v216
  %1381 = vmatprep.subr.mxu0 0.0
  %1382 = vmatpush1.msra.mxu0 %v215
  %1383 = vmatprep.subr.mxu0 0.0
  %1384 = vmatpush1.msra.mxu0 %v214
  %1385 = vmatprep.subr.mxu0 0.0
  %1386 = vmatpush1.msra.mxu0 %v213
  %1387 = vmatprep.subr.mxu0 0.0
  %1388 = vmatpush1.msra.mxu0 %v212
  %1389 = vmatprep.subr.mxu0 0.0
  %1390 = vmatpush1.msra.mxu0 %v211
  %1391 = vmatprep.subr.mxu0 0.0
  %1392 = vmatpush2.msra.mxu0 0.0
  %1393 = vmatprep.subr.mxu0 0.0
  %1394 = vmatpush2.msra.mxu0 0.0
  %1395 = vmatprep.subr.mxu0 0.0
  %1396 = vmatpush2.msra.mxu0 0.0
  %1397 = vmatprep.subr.mxu0 0.0
  %1398 = vmatpush2.msra.mxu0 0.0
  %1399 = vmatprep.subr.mxu0 0.0
  %1400 = vmatpush2.msra.mxu0 0.0
  %1401 = vmatprep.subr.mxu0 0.0
  %1402 = vmatpush2.msra.mxu0 0.0
  %1403 = vmatprep.subr.mxu0 0.0
  %1404 = vmatpush2.msra.mxu0 0.0
  %1405 = vmatprep.subr.mxu0 0.0
  %1406 = vmatpush2.msra.mxu0 0.0
  %1407 = vmatprep.subr.mxu0 0.0
  %1408 = vmatpush2.msra.mxu0 0.0
  %1409 = vmatprep.subr.mxu0 0.0
  %1410 = vmatpush2.msra.mxu0 0.0
  %1411 = vmatprep.subr.mxu0 0.0
  %1412 = vmatpush2.msra.mxu0 0.0
  %1413 = vmatprep.subr.mxu0 0.0
  %1414 = vmatpush2.msra.mxu0 0.0
  %1415 = vmatprep.subr.mxu0 0.0
  %1416 = vmatpush2.msra.mxu0 0.0
  %1417 = vmatprep.subr.mxu0 0.0
  %1418 = vmatpush2.msra.mxu0 0.0
  %1419 = vmatprep.subr.mxu0 0.0
  %1420 = vmatpush2.msra.mxu0 0.0
  %1421 = vmatprep.subr.mxu0 0.0
  %1422 = vmatpush2.msra.mxu0 0.0
  %1423 = vmatprep.mubr.f32.mxu0 0.0
  %1424 = vmatmul.mubr.f32.gmra.mxu0 %v1357
  %v1425 = vpop.f32.mrf.mxu0
  %v1426 = vadd.f32 %v328, %v1425
  %v1427 = vpop.f32.mrf.mxu0
  %1428 = vdwg.mxu0
  %v1429 = vxor.u32 %v1426, 2147483648
  %v1430 = vmul.f32 %v1429, 1.442695
  %v1431 = vpow.pop %v1430
  %v1432 = vadd.f32 %v1431, 1.0
  %v1433 = vrcp.pop %v1432
  %v1434 = vmul.f32 1.0, %v1433
  %v1435 = vtanh.pop %v1426
  %v1436 = vmul.f32 %v1434, %v1241
  %1438 = vrot.lane.b32.xlu0 %v1435, 64
  %v1439 = vpop.permute.xlu0 %1438
  %v1441 = vmul.f32 %v1434, %v1439
  %1443 = vrot.lane.b32.xlu0 %v1441, 32
  %v1444 = vpop.permute.xlu0 %1443
  %v1446 = vadd.f32 %v1436, %v1444
  %v1447 = vtanh.pop %v1446
  %1449 = vrot.lane.b32.xlu0 %v1447, 64
  %v1450 = vpop.permute.xlu0 %1449
  %v1452 = vmul.f32 %v1434, %v1450
  %s1453 = scalar_lea.vmem [#allocation2], 48
  %v1454 = vld [vmem:[%s1453] sm:$0xff]
  %v1455 = vsel %vm69, %v1349, 0
  %1457 = vmatprep.subr.mxu0 0.0
  %1458 = vmatpush1.msra.mxu0 0.0
  %1459 = vmatprep.subr.mxu0 0.0
  %1460 = vmatpush1.msra.mxu0 0.0
  %1461 = vmatprep.subr.mxu0 0.0
  %1462 = vmatpush1.msra.mxu0 0.0
  %1463 = vmatprep.subr.mxu0 0.0
  %1464 = vmatpush1.msra.mxu0 0.0
  %1465 = vmatprep.subr.mxu0 0.0
  %1466 = vmatpush1.msra.mxu0 0.0
  %1467 = vmatprep.subr.mxu0 0.0
  %1468 = vmatpush1.msra.mxu0 0.0
  %1469 = vmatprep.subr.mxu0 0.0
  %1470 = vmatpush1.msra.mxu0 0.0
  %1471 = vmatprep.subr.mxu0 0.0
  %1472 = vmatpush1.msra.mxu0 0.0
  %1473 = vmatprep.subr.mxu0 0.0
  %1474 = vmatpush1.msra.mxu0 0.0
  %1475 = vmatprep.subr.mxu0 0.0
  %1476 = vmatpush1.msra.mxu0 0.0
  %1477 = vmatprep.subr.mxu0 0.0
  %1478 = vmatpush1.msra.mxu0 0.0
  %1479 = vmatprep.subr.mxu0 0.0
  %1480 = vmatpush1.msra.mxu0 0.0
  %1481 = vmatprep.subr.mxu0 0.0
  %1482 = vmatpush1.msra.mxu0 %v210
  %1483 = vmatprep.subr.mxu0 0.0
  %1484 = vmatpush1.msra.mxu0 %v209
  %1485 = vmatprep.subr.mxu0 0.0
  %1486 = vmatpush1.msra.mxu0 %v208
  %1487 = vmatprep.subr.mxu0 0.0
  %1488 = vmatpush1.msra.mxu0 %v207
  %1489 = vmatprep.subr.mxu0 0.0
  %1490 = vmatpush2.msra.mxu0 0.0
  %1491 = vmatprep.subr.mxu0 0.0
  %1492 = vmatpush2.msra.mxu0 0.0
  %1493 = vmatprep.subr.mxu0 0.0
  %1494 = vmatpush2.msra.mxu0 0.0
  %1495 = vmatprep.subr.mxu0 0.0
  %1496 = vmatpush2.msra.mxu0 0.0
  %1497 = vmatprep.subr.mxu0 0.0
  %1498 = vmatpush2.msra.mxu0 0.0
  %1499 = vmatprep.subr.mxu0 0.0
  %1500 = vmatpush2.msra.mxu0 0.0
  %1501 = vmatprep.subr.mxu0 0.0
  %1502 = vmatpush2.msra.mxu0 0.0
  %1503 = vmatprep.subr.mxu0 0.0
  %1504 = vmatpush2.msra.mxu0 0.0
  %1505 = vmatprep.subr.mxu0 0.0
  %1506 = vmatpush2.msra.mxu0 0.0
  %1507 = vmatprep.subr.mxu0 0.0
  %1508 = vmatpush2.msra.mxu0 0.0
  %1509 = vmatprep.subr.mxu0 0.0
  %1510 = vmatpush2.msra.mxu0 0.0
  %1511 = vmatprep.subr.mxu0 0.0
  %1512 = vmatpush2.msra.mxu0 0.0
  %1513 = vmatprep.subr.mxu0 0.0
  %1514 = vmatpush2.msra.mxu0 0.0
  %1515 = vmatprep.subr.mxu0 0.0
  %1516 = vmatpush2.msra.mxu0 0.0
  %1517 = vmatprep.subr.mxu0 0.0
  %1518 = vmatpush2.msra.mxu0 0.0
  %1519 = vmatprep.subr.mxu0 0.0
  %1520 = vmatpush2.msra.mxu0 0.0
  %1521 = vmatprep.mubr.f32.mxu0 0.0
  %1522 = vmatmul.mubr.f32.gmra.mxu0 %v1455
  %v1523 = vpop.f32.mrf.mxu0
  %v1524 = vadd.f32 0.0, %v1523
  %v1525 = vpop.f32.mrf.mxu0
  %1526 = vdwg.mxu0
  %v1527 = vadd.f32 %v1454, %v1524
  %v1528 = vxor.u32 %v1527, 2147483648
  %v1529 = vmul.f32 %v1528, 1.442695
  %v1530 = vpow.pop %v1529
  %v1531 = vadd.f32 %v1530, 1.0
  %v1532 = vrcp.pop %v1531
  %v1533 = vmul.f32 1.0, %v1532
  %v1534 = vtanh.pop %v1527
  %v1535 = vmul.f32 %v1533, %v1340
  %1537 = vrot.lane.b32.xlu0 %v1534, 64
  %v1538 = vpop.permute.xlu0 %1537
  %v1540 = vmul.f32 %v1533, %v1538
  %1542 = vrot.lane.b32.xlu0 %v1540, 32
  %v1543 = vpop.permute.xlu0 %1542
  %v1545 = vadd.f32 %v1535, %v1543
  %v1546 = vtanh.pop %v1545
  %1548 = vrot.lane.b32.xlu0 %v1546, 64
  %v1549 = vpop.permute.xlu0 %1548
  %v1551 = vmul.f32 %v1533, %v1549
  %1553 = vrot.lane.b32.xlu0 %v1551, 32
  %v1554 = vpop.permute.xlu0 %1553
  %1557 = vrot.lane.b32.xlu0 %v1452, 64
  %v1558 = vpop.permute.xlu0 %1557
  %v1560 = vsel %vm69, %v1554, %v1558
  %v1562 = vsel %vm330, %v1560, 0
  %1564 = vmatprep.subr.mxu0 0.0
  %1565 = vmatpush1.msra.mxu0 0.0
  %1566 = vmatprep.subr.mxu0 0.0
  %1567 = vmatpush1.msra.mxu0 0.0
  %1568 = vmatprep.subr.mxu0 0.0
  %1569 = vmatpush1.msra.mxu0 0.0
  %1570 = vmatprep.subr.mxu0 0.0
  %1571 = vmatpush1.msra.mxu0 0.0
  %1572 = vmatprep.subr.mxu0 0.0
  %1573 = vmatpush1.msra.mxu0 0.0
  %1574 = vmatprep.subr.mxu0 0.0
  %1575 = vmatpush1.msra.mxu0 0.0
  %1576 = vmatprep.subr.mxu0 0.0
  %1577 = vmatpush1.msra.mxu0 0.0
  %1578 = vmatprep.subr.mxu0 0.0
  %1579 = vmatpush1.msra.mxu0 0.0
  %1580 = vmatprep.subr.mxu0 0.0
  %1581 = vmatpush1.msra.mxu0 %v218
  %1582 = vmatprep.subr.mxu0 0.0
  %1583 = vmatpush1.msra.mxu0 %v217
  %1584 = vmatprep.subr.mxu0 0.0
  %1585 = vmatpush1.msra.mxu0 %v216
  %1586 = vmatprep.subr.mxu0 0.0
  %1587 = vmatpush1.msra.mxu0 %v215
  %1588 = vmatprep.subr.mxu0 0.0
  %1589 = vmatpush1.msra.mxu0 %v214
  %1590 = vmatprep.subr.mxu0 0.0
  %1591 = vmatpush1.msra.mxu0 %v213
  %1592 = vmatprep.subr.mxu0 0.0
  %1593 = vmatpush1.msra.mxu0 %v212
  %1594 = vmatprep.subr.mxu0 0.0
  %1595 = vmatpush1.msra.mxu0 %v211
  %1596 = vmatprep.subr.mxu0 0.0
  %1597 = vmatpush2.msra.mxu0 0.0
  %1598 = vmatprep.subr.mxu0 0.0
  %1599 = vmatpush2.msra.mxu0 0.0
  %1600 = vmatprep.subr.mxu0 0.0
  %1601 = vmatpush2.msra.mxu0 0.0
  %1602 = vmatprep.subr.mxu0 0.0
  %1603 = vmatpush2.msra.mxu0 0.0
  %1604 = vmatprep.subr.mxu0 0.0
  %1605 = vmatpush2.msra.mxu0 0.0
  %1606 = vmatprep.subr.mxu0 0.0
  %1607 = vmatpush2.msra.mxu0 0.0
  %1608 = vmatprep.subr.mxu0 0.0
  %1609 = vmatpush2.msra.mxu0 0.0
  %1610 = vmatprep.subr.mxu0 0.0
  %1611 = vmatpush2.msra.mxu0 0.0
  %1612 = vmatprep.subr.mxu0 0.0
  %1613 = vmatpush2.msra.mxu0 0.0
  %1614 = vmatprep.subr.mxu0 0.0
  %1615 = vmatpush2.msra.mxu0 0.0
  %1616 = vmatprep.subr.mxu0 0.0
  %1617 = vmatpush2.msra.mxu0 0.0
  %1618 = vmatprep.subr.mxu0 0.0
  %1619 = vmatpush2.msra.mxu0 0.0
  %1620 = vmatprep.subr.mxu0 0.0
  %1621 = vmatpush2.msra.mxu0 0.0
  %1622 = vmatprep.subr.mxu0 0.0
  %1623 = vmatpush2.msra.mxu0 0.0
  %1624 = vmatprep.subr.mxu0 0.0
  %1625 = vmatpush2.msra.mxu0 0.0
  %1626 = vmatprep.subr.mxu0 0.0
  %1627 = vmatpush2.msra.mxu0 0.0
  %1628 = vmatprep.mubr.f32.mxu0 0.0
  %1629 = vmatmul.mubr.f32.gmra.mxu0 %v1562
  %v1630 = vpop.f32.mrf.mxu0
  %v1631 = vadd.f32 %v328, %v1630
  %v1632 = vpop.f32.mrf.mxu0
  %1633 = vdwg.mxu0
  %v1634 = vxor.u32 %v1631, 2147483648
  %v1635 = vmul.f32 %v1634, 1.442695
  %v1636 = vpow.pop %v1635
  %v1637 = vadd.f32 %v1636, 1.0
  %v1638 = vrcp.pop %v1637
  %v1639 = vmul.f32 1.0, %v1638
  %v1640 = vtanh.pop %v1631
  %v1641 = vmul.f32 %v1639, %v1446
  %1643 = vrot.lane.b32.xlu0 %v1640, 64
  %v1644 = vpop.permute.xlu0 %1643
  %v1646 = vmul.f32 %v1639, %v1644
  %1648 = vrot.lane.b32.xlu0 %v1646, 32
  %v1649 = vpop.permute.xlu0 %1648
  %v1651 = vadd.f32 %v1641, %v1649
  %v1652 = vtanh.pop %v1651
  %1654 = vrot.lane.b32.xlu0 %v1652, 64
  %v1655 = vpop.permute.xlu0 %1654
  %v1657 = vmul.f32 %v1639, %v1655
  %s1658 = scalar_lea.vmem [#allocation2], 56
  %v1659 = vld [vmem:[%s1658] sm:$0xff]
  %v1660 = vsel %vm69, %v1554, 0
  %1662 = vmatprep.subr.mxu0 0.0
  %1663 = vmatpush1.msra.mxu0 0.0
  %1664 = vmatprep.subr.mxu0 0.0
  %1665 = vmatpush1.msra.mxu0 0.0
  %1666 = vmatprep.subr.mxu0 0.0
  %1667 = vmatpush1.msra.mxu0 0.0
  %1668 = vmatprep.subr.mxu0 0.0
  %1669 = vmatpush1.msra.mxu0 0.0
  %1670 = vmatprep.subr.mxu0 0.0
  %1671 = vmatpush1.msra.mxu0 0.0
  %1672 = vmatprep.subr.mxu0 0.0
  %1673 = vmatpush1.msra.mxu0 0.0
  %1674 = vmatprep.subr.mxu0 0.0
  %1675 = vmatpush1.msra.mxu0 0.0
  %1676 = vmatprep.subr.mxu0 0.0
  %1677 = vmatpush1.msra.mxu0 0.0
  %1678 = vmatprep.subr.mxu0 0.0
  %1679 = vmatpush1.msra.mxu0 0.0
  %1680 = vmatprep.subr.mxu0 0.0
  %1681 = vmatpush1.msra.mxu0 0.0
  %1682 = vmatprep.subr.mxu0 0.0
  %1683 = vmatpush1.msra.mxu0 0.0
  %1684 = vmatprep.subr.mxu0 0.0
  %1685 = vmatpush1.msra.mxu0 0.0
  %1686 = vmatprep.subr.mxu0 0.0
  %1687 = vmatpush1.msra.mxu0 %v210
  %1688 = vmatprep.subr.mxu0 0.0
  %1689 = vmatpush1.msra.mxu0 %v209
  %1690 = vmatprep.subr.mxu0 0.0
  %1691 = vmatpush1.msra.mxu0 %v208
  %1692 = vmatprep.subr.mxu0 0.0
  %1693 = vmatpush1.msra.mxu0 %v207
  %1694 = vmatprep.subr.mxu0 0.0
  %1695 = vmatpush2.msra.mxu0 0.0
  %1696 = vmatprep.subr.mxu0 0.0
  %1697 = vmatpush2.msra.mxu0 0.0
  %1698 = vmatprep.subr.mxu0 0.0
  %1699 = vmatpush2.msra.mxu0 0.0
  %1700 = vmatprep.subr.mxu0 0.0
  %1701 = vmatpush2.msra.mxu0 0.0
  %1702 = vmatprep.subr.mxu0 0.0
  %1703 = vmatpush2.msra.mxu0 0.0
  %1704 = vmatprep.subr.mxu0 0.0
  %1705 = vmatpush2.msra.mxu0 0.0
  %1706 = vmatprep.subr.mxu0 0.0
  %1707 = vmatpush2.msra.mxu0 0.0
  %1708 = vmatprep.subr.mxu0 0.0
  %1709 = vmatpush2.msra.mxu0 0.0
  %1710 = vmatprep.subr.mxu0 0.0
  %1711 = vmatpush2.msra.mxu0 0.0
  %1712 = vmatprep.subr.mxu0 0.0
  %1713 = vmatpush2.msra.mxu0 0.0
  %1714 = vmatprep.subr.mxu0 0.0
  %1715 = vmatpush2.msra.mxu0 0.0
  %1716 = vmatprep.subr.mxu0 0.0
  %1717 = vmatpush2.msra.mxu0 0.0
  %1718 = vmatprep.subr.mxu0 0.0
  %1719 = vmatpush2.msra.mxu0 0.0
  %1720 = vmatprep.subr.mxu0 0.0
  %1721 = vmatpush2.msra.mxu0 0.0
  %1722 = vmatprep.subr.mxu0 0.0
  %1723 = vmatpush2.msra.mxu0 0.0
  %1724 = vmatprep.subr.mxu0 0.0
  %1725 = vmatpush2.msra.mxu0 0.0
  %1726 = vmatprep.mubr.f32.mxu0 0.0
  %1727 = vmatmul.mubr.f32.gmra.mxu0 %v1660
  %v1728 = vpop.f32.mrf.mxu0
  %v1729 = vadd.f32 0.0, %v1728
  %v1730 = vpop.f32.mrf.mxu0
  %1731 = vdwg.mxu0
  %v1732 = vadd.f32 %v1659, %v1729
  %v1733 = vxor.u32 %v1732, 2147483648
  %v1734 = vmul.f32 %v1733, 1.442695
  %v1735 = vpow.pop %v1734
  %v1736 = vadd.f32 %v1735, 1.0
  %v1737 = vrcp.pop %v1736
  %v1738 = vmul.f32 1.0, %v1737
  %v1739 = vtanh.pop %v1732
  %v1740 = vmul.f32 %v1738, %v1545
  %1742 = vrot.lane.b32.xlu0 %v1739, 64
  %v1743 = vpop.permute.xlu0 %1742
  %v1745 = vmul.f32 %v1738, %v1743
  %1747 = vrot.lane.b32.xlu0 %v1745, 32
  %v1748 = vpop.permute.xlu0 %1747
  %v1750 = vadd.f32 %v1740, %v1748
  %v1751 = vtanh.pop %v1750
  %1753 = vrot.lane.b32.xlu0 %v1751, 64
  %v1754 = vpop.permute.xlu0 %1753
  %v1756 = vmul.f32 %v1738, %v1754
  %1758 = vrot.lane.b32.xlu0 %v1756, 32
  %v1759 = vpop.permute.xlu0 %1758
  %1762 = vrot.lane.b32.xlu0 %v1657, 64
  %v1763 = vpop.permute.xlu0 %1762
  %v1765 = vsel %vm69, %v1759, %v1763
  %v1767 = vsel %vm330, %v1765, 0
  %1769 = vmatprep.subr.mxu0 0.0
  %1770 = vmatpush1.msra.mxu0 0.0
  %1771 = vmatprep.subr.mxu0 0.0
  %1772 = vmatpush1.msra.mxu0 0.0
  %1773 = vmatprep.subr.mxu0 0.0
  %1774 = vmatpush1.msra.mxu0 0.0
  %1775 = vmatprep.subr.mxu0 0.0
  %1776 = vmatpush1.msra.mxu0 0.0
  %1777 = vmatprep.subr.mxu0 0.0
  %1778 = vmatpush1.msra.mxu0 0.0
  %1779 = vmatprep.subr.mxu0 0.0
  %1780 = vmatpush1.msra.mxu0 0.0
  %1781 = vmatprep.subr.mxu0 0.0
  %1782 = vmatpush1.msra.mxu0 0.0
  %1783 = vmatprep.subr.mxu0 0.0
  %1784 = vmatpush1.msra.mxu0 0.0
  %1785 = vmatprep.subr.mxu0 0.0
  %1786 = vmatpush1.msra.mxu0 %v218
  %1787 = vmatprep.subr.mxu0 0.0
  %1788 = vmatpush1.msra.mxu0 %v217
  %1789 = vmatprep.subr.mxu0 0.0
  %1790 = vmatpush1.msra.mxu0 %v216
  %1791 = vmatprep.subr.mxu0 0.0
  %1792 = vmatpush1.msra.mxu0 %v215
  %1793 = vmatprep.subr.mxu0 0.0
  %1794 = vmatpush1.msra.mxu0 %v214
  %1795 = vmatprep.subr.mxu0 0.0
  %1796 = vmatpush1.msra.mxu0 %v213
  %1797 = vmatprep.subr.mxu0 0.0
  %1798 = vmatpush1.msra.mxu0 %v212
  %1799 = vmatprep.subr.mxu0 0.0
  %1800 = vmatpush1.msra.mxu0 %v211
  %1801 = vmatprep.subr.mxu0 0.0
  %1802 = vmatpush2.msra.mxu0 0.0
  %1803 = vmatprep.subr.mxu0 0.0
  %1804 = vmatpush2.msra.mxu0 0.0
  %1805 = vmatprep.subr.mxu0 0.0
  %1806 = vmatpush2.msra.mxu0 0.0
  %1807 = vmatprep.subr.mxu0 0.0
  %1808 = vmatpush2.msra.mxu0 0.0
  %1809 = vmatprep.subr.mxu0 0.0
  %1810 = vmatpush2.msra.mxu0 0.0
  %1811 = vmatprep.subr.mxu0 0.0
  %1812 = vmatpush2.msra.mxu0 0.0
  %1813 = vmatprep.subr.mxu0 0.0
  %1814 = vmatpush2.msra.mxu0 0.0
  %1815 = vmatprep.subr.mxu0 0.0
  %1816 = vmatpush2.msra.mxu0 0.0
  %1817 = vmatprep.subr.mxu0 0.0
  %1818 = vmatpush2.msra.mxu0 0.0
  %1819 = vmatprep.subr.mxu0 0.0
  %1820 = vmatpush2.msra.mxu0 0.0
  %1821 = vmatprep.subr.mxu0 0.0
  %1822 = vmatpush2.msra.mxu0 0.0
  %1823 = vmatprep.subr.mxu0 0.0
  %1824 = vmatpush2.msra.mxu0 0.0
  %1825 = vmatprep.subr.mxu0 0.0
  %1826 = vmatpush2.msra.mxu0 0.0
  %1827 = vmatprep.subr.mxu0 0.0
  %1828 = vmatpush2.msra.mxu0 0.0
  %1829 = vmatprep.subr.mxu0 0.0
  %1830 = vmatpush2.msra.mxu0 0.0
  %1831 = vmatprep.subr.mxu0 0.0
  %1832 = vmatpush2.msra.mxu0 0.0
  %1833 = vmatprep.mubr.f32.mxu0 0.0
  %1834 = vmatmul.mubr.f32.gmra.mxu0 %v1767
  %v1835 = vpop.f32.mrf.mxu0
  %v1836 = vadd.f32 %v328, %v1835
  %v1837 = vpop.f32.mrf.mxu0
  %1838 = vdwg.mxu0
  %v1839 = vxor.u32 %v1836, 2147483648
  %v1840 = vmul.f32 %v1839, 1.442695
  %v1841 = vpow.pop %v1840
  %v1842 = vadd.f32 %v1841, 1.0
  %v1843 = vrcp.pop %v1842
  %v1844 = vmul.f32 1.0, %v1843
  %v1845 = vtanh.pop %v1836
  %v1846 = vmul.f32 %v1844, %v1651
  %1848 = vrot.lane.b32.xlu0 %v1845, 64
  %v1849 = vpop.permute.xlu0 %1848
  %v1851 = vmul.f32 %v1844, %v1849
  %1853 = vrot.lane.b32.xlu0 %v1851, 32
  %v1854 = vpop.permute.xlu0 %1853
  %v1856 = vadd.f32 %v1846, %v1854
  %v1857 = vtanh.pop %v1856
  %1859 = vrot.lane.b32.xlu0 %v1857, 64
  %v1860 = vpop.permute.xlu0 %1859
  %v1862 = vmul.f32 %v1844, %v1860
  %v1863 = vld [vmem:[%s7] sm:$0xff]
  %v1864 = vld [vmem:[%s7 + $0x8] sm:$0xff]
  %v1865 = vld [vmem:[%s7 + $0x10] sm:$0xff]
  %v1866 = vld [vmem:[%s7 + $0x18] sm:$0xff]
  %v1867 = vld [vmem:[%s8] sm:$0x1]
  %v1869 = vlaneseq
  %v1870 = vshrl.u32 %v1869, 7
  %v1871 = vsub.s32 0, %v1870
  %v1872 = vrot.slane %v1867, %v1871
  %1875 = vrot.lane.b32.xlu0 %v1862, 32
  %v1876 = vpop.permute.xlu0 %1875
  %v1877 = vsel %vm69, %v1876, 0
  %1879 = vmatprep.subr.mxu0 0.0
  %1880 = vmatpush1.msra.mxu0 0.0
  %1881 = vmatprep.subr.mxu0 0.0
  %1882 = vmatpush1.msra.mxu0 0.0
  %1883 = vmatprep.subr.mxu0 0.0
  %1884 = vmatpush1.msra.mxu0 0.0
  %1885 = vmatprep.subr.mxu0 0.0
  %1886 = vmatpush1.msra.mxu0 0.0
  %1887 = vmatprep.subr.mxu0 0.0
  %1888 = vmatpush1.msra.mxu0 0.0
  %1889 = vmatprep.subr.mxu0 0.0
  %1890 = vmatpush1.msra.mxu0 0.0
  %1891 = vmatprep.subr.mxu0 0.0
  %1892 = vmatpush1.msra.mxu0 0.0
  %1893 = vmatprep.subr.mxu0 0.0
  %1894 = vmatpush1.msra.mxu0 0.0
  %1895 = vmatprep.subr.mxu0 0.0
  %1896 = vmatpush1.msra.mxu0 0.0
  %1897 = vmatprep.subr.mxu0 0.0
  %1898 = vmatpush1.msra.mxu0 0.0
  %1899 = vmatprep.subr.mxu0 0.0
  %1900 = vmatpush1.msra.mxu0 0.0
  %1901 = vmatprep.subr.mxu0 0.0
  %1902 = vmatpush1.msra.mxu0 0.0
  %1903 = vmatprep.subr.mxu0 0.0
  %1904 = vmatpush1.msra.mxu0 %v1866
  %1905 = vmatprep.subr.mxu0 0.0
  %1906 = vmatpush1.msra.mxu0 %v1865
  %1907 = vmatprep.subr.mxu0 0.0
  %1908 = vmatpush1.msra.mxu0 %v1864
  %1909 = vmatprep.subr.mxu0 0.0
  %1910 = vmatpush1.msra.mxu0 %v1863
  %1911 = vmatprep.subr.mxu0 0.0
  %1912 = vmatpush2.msra.mxu0 0.0
  %1913 = vmatprep.subr.mxu0 0.0
  %1914 = vmatpush2.msra.mxu0 0.0
  %1915 = vmatprep.subr.mxu0 0.0
  %1916 = vmatpush2.msra.mxu0 0.0
  %1917 = vmatprep.subr.mxu0 0.0
  %1918 = vmatpush2.msra.mxu0 0.0
  %1919 = vmatprep.subr.mxu0 0.0
  %1920 = vmatpush2.msra.mxu0 0.0
  %1921 = vmatprep.subr.mxu0 0.0
  %1922 = vmatpush2.msra.mxu0 0.0
  %1923 = vmatprep.subr.mxu0 0.0
  %1924 = vmatpush2.msra.mxu0 0.0
  %1925 = vmatprep.subr.mxu0 0.0
  %1926 = vmatpush2.msra.mxu0 0.0
  %1927 = vmatprep.subr.mxu0 0.0
  %1928 = vmatpush2.msra.mxu0 0.0
  %1929 = vmatprep.subr.mxu0 0.0
  %1930 = vmatpush2.msra.mxu0 0.0
  %1931 = vmatprep.subr.mxu0 0.0
  %1932 = vmatpush2.msra.mxu0 0.0
  %1933 = vmatprep.subr.mxu0 0.0
  %1934 = vmatpush2.msra.mxu0 0.0
  %1935 = vmatprep.subr.mxu0 0.0
  %1936 = vmatpush2.msra.mxu0 0.0
  %1937 = vmatprep.subr.mxu0 0.0
  %1938 = vmatpush2.msra.mxu0 0.0
  %1939 = vmatprep.subr.mxu0 0.0
  %1940 = vmatpush2.msra.mxu0 0.0
  %1941 = vmatprep.subr.mxu0 0.0
  %1942 = vmatpush2.msra.mxu0 0.0
  %1943 = vmatprep.mubr.f32.mxu0 0.0
  %1944 = vmatmul.mubr.f32.gmra.mxu0 %v1877
  %v1945 = vpop.f32.mrf.mxu0
  %v1946 = vadd.f32 %v1872, %v1945
  %v1947 = vpop.f32.mrf.mxu0
  %1948 = vdwg.mxu0
  %v1949 = vxor.u32 %v1946, 2147483648
  %v1950 = vmul.f32 %v1949, 1.442695
  %v1951 = vpow.pop %v1950
  %v1952 = vadd.f32 %v1951, 1.0
  %v1953 = vrcp.pop %v1952
  %v1954 = vmul.f32 1.0, %v1953
  %v1955 = vld [vmem:[%s1] sm:$0xff]
  %1956 = vrot.lane.b32.xlu0 %v1862, 34
  %v1957 = vpop.permute.xlu0 %1956
  %vm1959 = vcmask 15360
  %v1960 = vsel %vm1959, %v1955, %v1957
  %vm1961 = vcmask 277504
  %v1962 = vsel %vm1961, %v1960, 0.0
  %v1963 = vrot.slane %v1962, 4
  %v1964 = vadd.f32 %v1962, %v1963
  %v1965 = vrot.slane %v1964, 2
  %v1966 = vadd.f32 %v1964, %v1965
  %v1967 = vrot.slane %v1966, 1
  %v1968 = vadd.f32 %v1966, %v1967
  %v1969 = vrcp.pop 8.0
  %v1970 = vmul.f32 %v1968, %v1969
  %v1971 = vsub.f32 %v1960, %v1970
  %v1972 = vmul.f32 %v1971, %v1971
  %v1973 = vsel %vm1961, %v1972, 0.0
  %v1974 = vrot.slane %v1973, 4
  %v1975 = vadd.f32 %v1973, %v1974
  %v1976 = vrot.slane %v1975, 2
  %v1977 = vadd.f32 %v1975, %v1976
  %v1978 = vrot.slane %v1977, 1
  %v1979 = vadd.f32 %v1977, %v1978
  %v1980 = vmul.f32 %v1979, %v1969
  %v1981 = vadd.f32 %v1980, 1e-05
  %v1982 = vrsqrt.pop %v1981
  %v1983 = vmul.f32 %v1971, %v1982
  %v1984 = vld [vmem:[%s9] sm:$0x1]
  %v1986 = vlaneseq
  %v1987 = vshrl.u32 %v1986, 7
  %v1988 = vsub.s32 0, %v1987
  %v1989 = vrot.slane %v1984, %v1988
  %v1991 = vmul.f32 %v1983, %v1989
  %v1992 = vld [vmem:[%s10] sm:$0x1]
  %v1994 = vlaneseq
  %v1995 = vshrl.u32 %v1994, 7
  %v1996 = vsub.s32 0, %v1995
  %v1997 = vrot.slane %v1992, %v1996
  %v1999 = vadd.f32 %v1991, %v1997
  %v2000 = vld [vmem:[%s11] sm:$0xff]
  %v2001 = vld [vmem:[%s11 + $0x8] sm:$0xff]
  %v2002 = vld [vmem:[%s11 + $0x10] sm:$0xff]
  %v2003 = vld [vmem:[%s11 + $0x18] sm:$0xff]
  %v2004 = vld [vmem:[%s11 + $0x20] sm:$0x3]
  %v2005 = vld [vmem:[%s12] sm:$0x1]
  %v2007 = vlaneseq
  %v2008 = vshrl.u32 %v2007, 7
  %v2009 = vsub.s32 0, %v2008
  %v2010 = vrot.slane %v2005, %v2009
  %v2013 = vsel %vm1961, %v1999, 0
  %vm2015 = vcmask 1041408
  %v2017 = vsel %vm2015, %v2004, 0
  %2019 = vmatprep.subr.mxu0 0.0
  %2020 = vmatpush1.msra.mxu0 0.0
  %2021 = vmatprep.subr.mxu0 0.0
  %2022 = vmatpush1.msra.mxu0 0.0
  %2023 = vmatprep.subr.mxu0 0.0
  %2024 = vmatpush1.msra.mxu0 0.0
  %2025 = vmatprep.subr.mxu0 0.0
  %2026 = vmatpush1.msra.mxu0 0.0
  %2027 = vmatprep.subr.mxu0 0.0
  %2028 = vmatpush1.msra.mxu0 0.0
  %2029 = vmatprep.subr.mxu0 0.0
  %2030 = vmatpush1.msra.mxu0 0.0
  %2031 = vmatprep.subr.mxu0 0.0
  %2032 = vmatpush1.msra.mxu0 0.0
  %2033 = vmatprep.subr.mxu0 0.0
  %2034 = vmatpush1.msra.mxu0 0.0
  %2035 = vmatprep.subr.mxu0 0.0
  %2036 = vmatpush1.msra.mxu0 0.0
  %2037 = vmatprep.subr.mxu0 0.0
  %2038 = vmatpush1.msra.mxu0 0.0
  %2039 = vmatprep.subr.mxu0 0.0
  %2040 = vmatpush1.msra.mxu0 0.0
  %2041 = vmatprep.subr.mxu0 0.0
  %2042 = vmatpush1.msra.mxu0 %v2017
  %2043 = vmatprep.subr.mxu0 0.0
  %2044 = vmatpush1.msra.mxu0 %v2003
  %2045 = vmatprep.subr.mxu0 0.0
  %2046 = vmatpush1.msra.mxu0 %v2002
  %2047 = vmatprep.subr.mxu0 0.0
  %2048 = vmatpush1.msra.mxu0 %v2001
  %2049 = vmatprep.subr.mxu0 0.0
  %2050 = vmatpush1.msra.mxu0 %v2000
  %2051 = vmatprep.subr.mxu0 0.0
  %2052 = vmatpush2.msra.mxu0 0.0
  %2053 = vmatprep.subr.mxu0 0.0
  %2054 = vmatpush2.msra.mxu0 0.0
  %2055 = vmatprep.subr.mxu0 0.0
  %2056 = vmatpush2.msra.mxu0 0.0
  %2057 = vmatprep.subr.mxu0 0.0
  %2058 = vmatpush2.msra.mxu0 0.0
  %2059 = vmatprep.subr.mxu0 0.0
  %2060 = vmatpush2.msra.mxu0 0.0
  %2061 = vmatprep.subr.mxu0 0.0
  %2062 = vmatpush2.msra.mxu0 0.0
  %2063 = vmatprep.subr.mxu0 0.0
  %2064 = vmatpush2.msra.mxu0 0.0
  %2065 = vmatprep.subr.mxu0 0.0
  %2066 = vmatpush2.msra.mxu0 0.0
  %2067 = vmatprep.subr.mxu0 0.0
  %2068 = vmatpush2.msra.mxu0 0.0
  %2069 = vmatprep.subr.mxu0 0.0
  %2070 = vmatpush2.msra.mxu0 0.0
  %2071 = vmatprep.subr.mxu0 0.0
  %2072 = vmatpush2.msra.mxu0 0.0
  %2073 = vmatprep.subr.mxu0 0.0
  %2074 = vmatpush2.msra.mxu0 0.0
  %2075 = vmatprep.subr.mxu0 0.0
  %2076 = vmatpush2.msra.mxu0 0.0
  %2077 = vmatprep.subr.mxu0 0.0
  %2078 = vmatpush2.msra.mxu0 0.0
  %2079 = vmatprep.subr.mxu0 0.0
  %2080 = vmatpush2.msra.mxu0 0.0
  %2081 = vmatprep.subr.mxu0 0.0
  %2082 = vmatpush2.msra.mxu0 0.0
  %2083 = vmatprep.mubr.f32.mxu0 0.0
  %2084 = vmatmul.mubr.f32.gmra.mxu0 %v2013
  %v2085 = vpop.f32.mrf.mxu0
  %v2086 = vadd.f32 %v2010, %v2085
  %v2087 = vpop.f32.mrf.mxu0
  %2088 = vdwg.mxu0
  %v2089 = vmax.f32 %v2086, 0.0
  %v2090 = vld [vmem:[%s13] sm:$0xff]
  %v2091 = vld [vmem:[%s13 + $0x8] sm:$0xff]
  %v2092 = vld [vmem:[%s13 + $0x10] sm:$0xff]
  %v2093 = vld [vmem:[%s13 + $0x18] sm:$0xff]
  %v2094 = vld [vmem:[%s14] sm:$0x1]
  %v2096 = vlaneseq
  %v2097 = vshrl.u32 %v2096, 7
  %v2098 = vsub.s32 0, %v2097
  %v2099 = vrot.slane %v2094, %v2098
  %v2102 = vsel %vm69, %v2089, 0
  %2104 = vmatprep.subr.mxu0 0.0
  %2105 = vmatpush1.msra.mxu0 0.0
  %2106 = vmatprep.subr.mxu0 0.0
  %2107 = vmatpush1.msra.mxu0 0.0
  %2108 = vmatprep.subr.mxu0 0.0
  %2109 = vmatpush1.msra.mxu0 0.0
  %2110 = vmatprep.subr.mxu0 0.0
  %2111 = vmatpush1.msra.mxu0 0.0
  %2112 = vmatprep.subr.mxu0 0.0
  %2113 = vmatpush1.msra.mxu0 0.0
  %2114 = vmatprep.subr.mxu0 0.0
  %2115 = vmatpush1.msra.mxu0 0.0
  %2116 = vmatprep.subr.mxu0 0.0
  %2117 = vmatpush1.msra.mxu0 0.0
  %2118 = vmatprep.subr.mxu0 0.0
  %2119 = vmatpush1.msra.mxu0 0.0
  %2120 = vmatprep.subr.mxu0 0.0
  %2121 = vmatpush1.msra.mxu0 0.0
  %2122 = vmatprep.subr.mxu0 0.0
  %2123 = vmatpush1.msra.mxu0 0.0
  %2124 = vmatprep.subr.mxu0 0.0
  %2125 = vmatpush1.msra.mxu0 0.0
  %2126 = vmatprep.subr.mxu0 0.0
  %2127 = vmatpush1.msra.mxu0 0.0
  %2128 = vmatprep.subr.mxu0 0.0
  %2129 = vmatpush1.msra.mxu0 %v2093
  %2130 = vmatprep.subr.mxu0 0.0
  %2131 = vmatpush1.msra.mxu0 %v2092
  %2132 = vmatprep.subr.mxu0 0.0
  %2133 = vmatpush1.msra.mxu0 %v2091
  %2134 = vmatprep.subr.mxu0 0.0
  %2135 = vmatpush1.msra.mxu0 %v2090
  %2136 = vmatprep.subr.mxu0 0.0
  %2137 = vmatpush2.msra.mxu0 0.0
  %2138 = vmatprep.subr.mxu0 0.0
  %2139 = vmatpush2.msra.mxu0 0.0
  %2140 = vmatprep.subr.mxu0 0.0
  %2141 = vmatpush2.msra.mxu0 0.0
  %2142 = vmatprep.subr.mxu0 0.0
  %2143 = vmatpush2.msra.mxu0 0.0
  %2144 = vmatprep.subr.mxu0 0.0
  %2145 = vmatpush2.msra.mxu0 0.0
  %2146 = vmatprep.subr.mxu0 0.0
  %2147 = vmatpush2.msra.mxu0 0.0
  %2148 = vmatprep.subr.mxu0 0.0
  %2149 = vmatpush2.msra.mxu0 0.0
  %2150 = vmatprep.subr.mxu0 0.0
  %2151 = vmatpush2.msra.mxu0 0.0
  %2152 = vmatprep.subr.mxu0 0.0
  %2153 = vmatpush2.msra.mxu0 0.0
  %2154 = vmatprep.subr.mxu0 0.0
  %2155 = vmatpush2.msra.mxu0 0.0
  %2156 = vmatprep.subr.mxu0 0.0
  %2157 = vmatpush2.msra.mxu0 0.0
  %2158 = vmatprep.subr.mxu0 0.0
  %2159 = vmatpush2.msra.mxu0 0.0
  %2160 = vmatprep.subr.mxu0 0.0
  %2161 = vmatpush2.msra.mxu0 0.0
  %2162 = vmatprep.subr.mxu0 0.0
  %2163 = vmatpush2.msra.mxu0 0.0
  %2164 = vmatprep.subr.mxu0 0.0
  %2165 = vmatpush2.msra.mxu0 0.0
  %2166 = vmatprep.subr.mxu0 0.0
  %2167 = vmatpush2.msra.mxu0 0.0
  %2168 = vmatprep.mubr.f32.mxu0 0.0
  %2169 = vmatmul.mubr.f32.gmra.mxu0 %v2102
  %v2170 = vpop.f32.mrf.mxu0
  %v2171 = vadd.f32 %v2099, %v2170
  %v2172 = vpop.f32.mrf.mxu0
  %2173 = vdwg.mxu0
  %v2174 = vxor.u32 %v2171, 2147483648
  %v2175 = vmul.f32 %v2174, 1.442695
  %v2176 = vpow.pop %v2175
  %v2177 = vadd.f32 %v2176, 1.0
  %v2178 = vrcp.pop %v2177
  %v2179 = vmul.f32 1.0, %v2178
  %2181 = vrot.lane.b32.xlu0 %v1954, 2
  %v2182 = vpop.permute.xlu0 %2181
  %v2184 = vsel %vm1959, %v2179, %v2182
  %vm2185 = vcmask 31744
  %2186 = vst.msk [vmem:[%s15] sm:$0xff] %vm2185, %v2184
  // Predicated region
  $region62: #{devmap_lstm_forward.1} parent=0 // pred_check
    _
  $region63: #{devmap_lstm_forward.1} parent=0 // pred_check_branch
    %2188 = sbr.rel (0) target = $region65
  $region64: #{devmap_lstm_forward.1} parent=0 // pred_region
    _
  $region65: #{devmap_lstm_forward.1} parent=0 // pred_fallthru
    _
  // Predicated region
  $region66: #{devmap_lstm_forward.1} parent=0 // pred_check
    _
  $region67: #{devmap_lstm_forward.1} parent=0 // pred_check_branch
    %2190 = sbr.rel (0) target = $region69
  $region68: #{devmap_lstm_forward.1} parent=0 // pred_region
    _
  $region69: #{devmap_lstm_forward.1} parent=0 // pred_fallthru
    _

</llo_original>
